<compile_context>
chip_gen: v6e
topology: v6e:2x2x1
jax: 0.10.0
libtpu: 0.0.40
codegen_flags: <defaults>
</compile_context>

<pallas_src>
import jax
import jax.numpy as jnp
from jax import lax
from jax.experimental import pallas as pl
from jax.experimental.pallas import tpu as pltpu

# ----- synthetic hyperparameters (mirroring hyperParams in __init__) -----------
WORD_NUM        = 100
WORD_EMB_SIZE   = 32          # hyperParams.wordEmbSize
RNN_HIDDEN_SIZE = 32          # hyperParams.rnnHiddenSize (bidirectional total)
LABEL_SIZE      = 8           # hyperParams.labelSize
BATCH           = 2
SENT_SIZE       = 8
H2 = RNN_HIDDEN_SIZE // 2     # per-direction hidden size


def rnn_labeler_kernel(x_ref,                      # (T*B, E) time-major rows
                       wih_ref,                    # (E, 8*H2) fused input weights (+dir interleaved per gate)
                       whh_ref,                    # (2*H2, 8*H2) fused block-diagonal recurrent weights
                       b_ref,                      # (1, 8*H2) fused biases (b_ih + b_hh, both dirs)
                       h0_ref, c0_ref,             # (B, 2*H2) = [fwd | bwd] initial states
                       wlin_ref, blin_ref,         # (2*H2, L), (1, L)
                       out_ref,                    # (T*B, L) time-major rows
                       hsf_ref, hsb_ref):          # scratch: fwd / bwd hiddens, (T*B, H2) each
    TB, _ = x_ref.shape
    B, GH = h0_ref.shape          # GH = 2*H2 (both directions)
    H2k = GH // 2
    T = TB // B                   # compile-time constant -> full unroll

    # ---- prologue: hoisted lane-dense input projection, biases folded in ------
    gates_x = (jnp.dot(x_ref[...], wih_ref[...],
                       preferred_element_type=jnp.float32) + b_ref[...])   # (T*B, 4*GH)

    # fwd/bwd lane mask (hoisted): within each 32-lane gate block, first H2 lanes = fwd
    lane = lax.broadcasted_iota(jnp.int32, (B, 4 * GH), 1)
    fwd_mask = (lane % GH) < H2k

    whh = whh_ref[...]
    h = h0_ref[...]               # (B, GH) = [h_fwd | h_bwd]
    c = c0_ref[...]

    # ---- fused + unrolled bidirectional recurrence ----------------------------
    # Step s advances the forward chain at time s and the backward chain at
    # time T-1-s, both carried in the same (B, 2*H2) state.
    for s in range(T):
        tf = s
        tb = T - 1 - s
        gx = jnp.where(fwd_mask,
                       gates_x[tf * B:(tf + 1) * B, :],
                       gates_x[tb * B:(tb + 1) * B, :])
        gates = gx + jnp.dot(h, whh, preferred_element_type=jnp.float32)   # (B, 4*GH)
        # PyTorch gate order i, f, g, o — each slice is [fwd | bwd], 2*H2 wide
        i = jax.nn.sigmoid(gates[:, 0:GH])
        f = jax.nn.sigmoid(gates[:, GH:2 * GH])
        g = jnp.tanh(gates[:, 2 * GH:3 * GH])
        o = jax.nn.sigmoid(gates[:, 3 * GH:4 * GH])
        c = f * c + i * g
        h = o * jnp.tanh(c)
        # stash hiddens at their OUTPUT time position (static indices, off the chain)
        hsf_ref[tf * B:(tf + 1) * B, :] = h[:, 0:H2k]
        hsb_ref[tb * B:(tb + 1) * B, :] = h[:, H2k:GH]

    # ---- epilogue: single label projection + single store ---------------------
    # concat(h_fwd, h_bwd) @ W.T + b  ==  h_fwd @ W[:H2] + h_bwd @ W[H2:] + b
    wlin = wlin_ref[...]
    logits = (jnp.dot(hsf_ref[...], wlin[0:H2k, :], preferred_element_type=jnp.float32)
              + jnp.dot(hsb_ref[...], wlin[H2k:GH, :], preferred_element_type=jnp.float32)
              + blin_ref[...])
    out_ref[...] = logits


def _interleave_gate_cols(a_f, a_b, h2):
    """(rows, 4*h2) fwd + (rows, 4*h2) bwd -> (rows, 8*h2) with per-gate column
    blocks laid out [gate_fwd | gate_bwd] for gates i, f, g, o."""
    rows = a_f.shape[0]
    af = a_f.reshape(rows, 4, h2)
    ab = a_b.reshape(rows, 4, h2)
    return jnp.concatenate([af, ab], axis=-1).reshape(rows, 8 * h2)


@jax.jit
def rnn_labeler_forward(feat, emb_table, params, h0, c0):
    """feat: (B, T) int32 word ids.  Returns (B*T, LABEL_SIZE) float32."""
    B, T = feat.shape
    E = emb_table.shape[1]

    # Embedding lookup (glue, plain JAX gather).
    x = jnp.take(emb_table, feat, axis=0)                              # (B, T, E)
    # TODO(synk): training-mode Dropout(dropProb) not implemented; eval mode == identity.
    x2d = jnp.transpose(x, (1, 0, 2)).reshape(T * B, E).astype(jnp.float32)  # time-major rows

    (wih_f, whh_f, b_f, wih_b, whh_b, b_b, lin_w, lin_b) = params

    # Fuse the two directions into lane-dense weights for the kernel.
    wih_fused = _interleave_gate_cols(wih_f, wih_b, H2)                # (E, 8*H2)
    b_fused = _interleave_gate_cols(b_f, b_b, H2)                      # (1, 8*H2)
    zeros_h = jnp.zeros_like(whh_f)
    whh_fused = jnp.concatenate(
        [_interleave_gate_cols(whh_f, zeros_h, H2),                    # fwd rows -> fwd cols
         _interleave_gate_cols(zeros_h, whh_b, H2)], axis=0)           # bwd rows -> bwd cols

    h0cat = jnp.concatenate([h0[0], h0[1]], axis=-1)                   # (B, 2*H2)
    c0cat = jnp.concatenate([c0[0], c0[1]], axis=-1)                   # (B, 2*H2)

    out_tm = pl.pallas_call(
        rnn_labeler_kernel,
        out_shape=jax.ShapeDtypeStruct((T * B, LABEL_SIZE), jnp.float32),
        grid_spec=pltpu.PrefetchScalarGridSpec(
            num_scalar_prefetch=0,
            grid=(1,),
            in_specs=[
                pl.BlockSpec((T * B, E), lambda i: (0, 0)),
                pl.BlockSpec((E, 8 * H2), lambda i: (0, 0)),
                pl.BlockSpec((2 * H2, 8 * H2), lambda i: (0, 0)),
                pl.BlockSpec((1, 8 * H2), lambda i: (0, 0)),
                pl.BlockSpec((B, 2 * H2), lambda i: (0, 0)),
                pl.BlockSpec((B, 2 * H2), lambda i: (0, 0)),
                pl.BlockSpec((2 * H2, LABEL_SIZE), lambda i: (0, 0)),
                pl.BlockSpec((1, LABEL_SIZE), lambda i: (0, 0)),
            ],
            out_specs=pl.BlockSpec((T * B, LABEL_SIZE), lambda i: (0, 0)),
            scratch_shapes=[pltpu.VMEM((T * B, H2), jnp.float32),
                            pltpu.VMEM((T * B, H2), jnp.float32)],
        ),
        compiler_params=pltpu.CompilerParams(dimension_semantics=("arbitrary",)),
    )(x2d, wih_fused, whh_fused, b_fused, h0cat, c0cat, lin_w, lin_b)

    # torch.cat(LSTMOutputs, 0): rows ordered batch-major -> (B*T, L)
    return jnp.transpose(out_tm.reshape(T, B, LABEL_SIZE), (1, 0, 2)).reshape(B * T, LABEL_SIZE)


def init_params(key):
    """Deterministic synthetic parameters with PyTorch-equivalent shapes
    (stored pre-transposed: W_ih -> (E, 4*H2), W_hh -> (H2, 4*H2), linear
     weight -> (H, L); LSTM biases b_ih + b_hh summed into one (1, 4*H2))."""
    ks = jax.random.split(key, 12)
    k_lstm = 1.0 / jnp.sqrt(H2)
    k_lin = 1.0 / jnp.sqrt(RNN_HIDDEN_SIZE)
    u = lambda k, shape, bound: jax.random.uniform(
        k, shape, jnp.float32, minval=-bound, maxval=bound)

    emb_table = jax.random.normal(ks[0], (WORD_NUM, WORD_EMB_SIZE), jnp.float32)

    wih_f = u(ks[1], (WORD_EMB_SIZE, 4 * H2), k_lstm)
    whh_f = u(ks[2], (H2, 4 * H2), k_lstm)
    b_f = u(ks[3], (1, 4 * H2), k_lstm) + u(ks[4], (1, 4 * H2), k_lstm)   # b_ih + b_hh (independent keys)
    wih_b = u(ks[5], (WORD_EMB_SIZE, 4 * H2), k_lstm)
    whh_b = u(ks[6], (H2, 4 * H2), k_lstm)
    b_b = u(ks[7], (1, 4 * H2), k_lstm) + u(ks[8], (1, 4 * H2), k_lstm)

    lin_w = u(ks[9], (RNN_HIDDEN_SIZE, LABEL_SIZE), k_lin)
    lin_b = u(ks[10], (1, LABEL_SIZE), k_lin)

    return emb_table, (wih_f, whh_f, b_f, wih_b, whh_b, b_b, lin_w, lin_b)


if __name__ == "__main__":
    root = jax.random.PRNGKey(0)
    k_params, k_feat, k_h0, k_c0 = jax.random.split(root, 4)

    emb_table, params = init_params(k_params)

    # feat: (batch, sentSize) word ids
    feat = jax.random.randint(k_feat, (BATCH, SENT_SIZE), 0, WORD_NUM, dtype=jnp.int32)

    # init_hidden(batch): (2, batch, rnnHiddenSize // 2), deterministic here
    h0 = jax.random.normal(k_h0, (2, BATCH, H2), jnp.float32)
    c0 = jax.random.normal(k_c0, (2, BATCH, H2), jnp.float32)

    out = rnn_labeler_forward(feat, emb_table, params, h0, c0)
    out = jax.block_until_ready(out)

    assert out.shape == (BATCH * SENT_SIZE, LABEL_SIZE), out.shape
    assert out.dtype == jnp.float32
    print("KERNEL_OK")
</pallas_src>

<mosaic_0001>
module attributes {stable_mosaic.version = 11 : i64} {
  func.func @rnn_labeler_kernel(%arg0: i32, %arg1: memref<16x32xf32, #tpu.memory_space<vmem>>, %arg2: memref<32x128xf32, #tpu.memory_space<vmem>>, %arg3: memref<32x128xf32, #tpu.memory_space<vmem>>, %arg4: memref<1x128xf32, #tpu.memory_space<vmem>>, %arg5: memref<2x32xf32, #tpu.memory_space<vmem>>, %arg6: memref<2x32xf32, #tpu.memory_space<vmem>>, %arg7: memref<32x8xf32, #tpu.memory_space<vmem>>, %arg8: memref<1x8xf32, #tpu.memory_space<vmem>>, %arg9: memref<16x8xf32, #tpu.memory_space<vmem>>, %arg10: memref<16x16xf32, #tpu.memory_space<vmem>>, %arg11: memref<16x16xf32, #tpu.memory_space<vmem>>) attributes {dimension_semantics = [#tpu.dimension_semantics<arbitrary>], iteration_bounds = array<i64: 1>, scalar_prefetch = 0 : i64, scratch_operands = 2 : i64, tpu.core_type = #tpu.core_type<tc>, window_params = [{pipeline_mode = #tpu.pipeline_mode<synchronous>, transform_indices = @transform_0, window_bounds = array<i64: 16, 32>}, {pipeline_mode = #tpu.pipeline_mode<synchronous>, transform_indices = @transform_1, window_bounds = array<i64: 32, 128>}, {pipeline_mode = #tpu.pipeline_mode<synchronous>, transform_indices = @transform_2, window_bounds = array<i64: 32, 128>}, {pipeline_mode = #tpu.pipeline_mode<synchronous>, transform_indices = @transform_3, window_bounds = array<i64: 1, 128>}, {pipeline_mode = #tpu.pipeline_mode<synchronous>, transform_indices = @transform_4, window_bounds = array<i64: 2, 32>}, {pipeline_mode = #tpu.pipeline_mode<synchronous>, transform_indices = @transform_5, window_bounds = array<i64: 2, 32>}, {pipeline_mode = #tpu.pipeline_mode<synchronous>, transform_indices = @transform_6, window_bounds = array<i64: 32, 8>}, {pipeline_mode = #tpu.pipeline_mode<synchronous>, transform_indices = @transform_7, window_bounds = array<i64: 1, 8>}, {pipeline_mode = #tpu.pipeline_mode<synchronous>, transform_indices = @transform_8, window_bounds = array<i64: 16, 8>}]} {
    %c0 = arith.constant 0 : index
    %c0_0 = arith.constant 0 : index
    %0 = vector.load %arg1[%c0, %c0_0] : memref<16x32xf32, #tpu.memory_space<vmem>>, vector<16x32xf32>
    %c0_1 = arith.constant 0 : index
    %c0_2 = arith.constant 0 : index
    %1 = vector.load %arg2[%c0_1, %c0_2] : memref<32x128xf32, #tpu.memory_space<vmem>>, vector<32x128xf32>
    %cst = arith.constant dense<0.000000e+00> : vector<16x128xf32>
    %2 = tpu.matmul %0, %1, %cst {dimension_numbers = #tpu.dot_dimension_numbers<[1], [0], [0], [1], [0, 0, 1, 1], [], []>} : vector<16x32xf32>, vector<32x128xf32>, vector<16x128xf32> -> vector<16x128xf32>
    %c0_3 = arith.constant 0 : index
    %c0_4 = arith.constant 0 : index
    %3 = vector.load %arg4[%c0_3, %c0_4] : memref<1x128xf32, #tpu.memory_space<vmem>>, vector<1x128xf32>
    %4 = vector.broadcast %3 : vector<1x128xf32> to vector<16x128xf32>
    %5 = arith.addf %2, %4 : vector<16x128xf32>
    %6 = tpu.iota {dimensions = array<i32: 1>} : vector<2x128xi32>
    %c32_i32 = arith.constant 32 : i32
    %c0_i32 = arith.constant 0 : i32
    %7 = arith.cmpi eq, %c32_i32, %c0_i32 : i32
    %c1_i32 = arith.constant 1 : i32
    %8 = arith.select %7, %c1_i32, %c32_i32 : i32
    %9 = vector.broadcast %8 : i32 to vector<2x128xi32>
    %10 = arith.remsi %6, %9 : vector<2x128xi32>
    %c0_i32_5 = arith.constant 0 : i32
    %11 = vector.broadcast %c0_i32_5 : i32 to vector<2x128xi32>
    %12 = arith.cmpi ne, %10, %11 : vector<2x128xi32>
    %c0_i32_6 = arith.constant 0 : i32
    %13 = vector.broadcast %c0_i32_6 : i32 to vector<2x128xi32>
    %14 = arith.cmpi slt, %10, %13 : vector<2x128xi32>
    %c0_i32_7 = arith.constant 0 : i32
    %15 = arith.cmpi slt, %8, %c0_i32_7 : i32
    %16 = vector.broadcast %15 : i1 to vector<2x128xi1>
    %17 = vector.broadcast %16 : vector<2x128xi1> to vector<2x128xi1>
    %18 = arith.xori %14, %17 : vector<2x128xi1>
    %19 = arith.andi %18, %12 : vector<2x128xi1>
    %20 = vector.broadcast %8 : i32 to vector<2x128xi32>
    %21 = arith.addi %10, %20 : vector<2x128xi32>
    %22 = arith.select %19, %21, %10 : vector<2x128xi1>, vector<2x128xi32>
    %c16_i32 = arith.constant 16 : i32
    %23 = vector.broadcast %c16_i32 : i32 to vector<2x128xi32>
    %24 = arith.cmpi slt, %22, %23 : vector<2x128xi32>
    %c0_8 = arith.constant 0 : index
    %c0_9 = arith.constant 0 : index
    %25 = vector.load %arg3[%c0_8, %c0_9] : memref<32x128xf32, #tpu.memory_space<vmem>>, vector<32x128xf32>
    %c0_10 = arith.constant 0 : index
    %c0_11 = arith.constant 0 : index
    %26 = vector.load %arg5[%c0_10, %c0_11] : memref<2x32xf32, #tpu.memory_space<vmem>>, vector<2x32xf32>
    %c0_12 = arith.constant 0 : index
    %c0_13 = arith.constant 0 : index
    %27 = vector.load %arg6[%c0_12, %c0_13] : memref<2x32xf32, #tpu.memory_space<vmem>>, vector<2x32xf32>
    %28 = vector.extract_strided_slice %5 {offsets = [0, 0], sizes = [2, 128], strides = [1, 1]} : vector<16x128xf32> to vector<2x128xf32>
    %29 = vector.extract_strided_slice %5 {offsets = [14, 0], sizes = [2, 128], strides = [1, 1]} : vector<16x128xf32> to vector<2x128xf32>
    %30 = arith.select %24, %28, %29 : vector<2x128xi1>, vector<2x128xf32>
    %cst_14 = arith.constant dense<0.000000e+00> : vector<2x128xf32>
    %31 = tpu.matmul %26, %25, %cst_14 {dimension_numbers = #tpu.dot_dimension_numbers<[1], [0], [0], [1], [0, 0, 1, 1], [], []>} : vector<2x32xf32>, vector<32x128xf32>, vector<2x128xf32> -> vector<2x128xf32>
    %32 = arith.addf %30, %31 : vector<2x128xf32>
    %33 = vector.extract_strided_slice %32 {offsets = [0, 0], sizes = [2, 32], strides = [1, 1]} : vector<2x128xf32> to vector<2x32xf32>
    %34 = arith.negf %33 : vector<2x32xf32>
    %35 = math.exp %34 : vector<2x32xf32>
    %cst_15 = arith.constant 1.000000e+00 : f32
    %36 = vector.broadcast %cst_15 : f32 to vector<2x32xf32>
    %37 = arith.addf %36, %35 : vector<2x32xf32>
    %38 = arith.divf %36, %37 : vector<2x32xf32>
    %39 = vector.extract_strided_slice %32 {offsets = [0, 32], sizes = [2, 32], strides = [1, 1]} : vector<2x128xf32> to vector<2x32xf32>
    %40 = arith.negf %39 : vector<2x32xf32>
    %41 = math.exp %40 : vector<2x32xf32>
    %cst_16 = arith.constant 1.000000e+00 : f32
    %42 = vector.broadcast %cst_16 : f32 to vector<2x32xf32>
    %43 = arith.addf %42, %41 : vector<2x32xf32>
    %44 = arith.divf %42, %43 : vector<2x32xf32>
    %45 = vector.extract_strided_slice %32 {offsets = [0, 64], sizes = [2, 32], strides = [1, 1]} : vector<2x128xf32> to vector<2x32xf32>
    %46 = math.tanh %45 : vector<2x32xf32>
    %47 = vector.extract_strided_slice %32 {offsets = [0, 96], sizes = [2, 32], strides = [1, 1]} : vector<2x128xf32> to vector<2x32xf32>
    %48 = arith.negf %47 : vector<2x32xf32>
    %49 = math.exp %48 : vector<2x32xf32>
    %cst_17 = arith.constant 1.000000e+00 : f32
    %50 = vector.broadcast %cst_17 : f32 to vector<2x32xf32>
    %51 = arith.addf %50, %49 : vector<2x32xf32>
    %52 = arith.divf %50, %51 : vector<2x32xf32>
    %53 = arith.mulf %44, %27 : vector<2x32xf32>
    %54 = arith.mulf %38, %46 : vector<2x32xf32>
    %55 = arith.addf %53, %54 : vector<2x32xf32>
    %56 = math.tanh %55 : vector<2x32xf32>
    %57 = arith.mulf %52, %56 : vector<2x32xf32>
    %58 = vector.extract_strided_slice %57 {offsets = [0, 0], sizes = [2, 16], strides = [1, 1]} : vector<2x32xf32> to vector<2x16xf32>
    %c0_18 = arith.constant 0 : index
    %c0_19 = arith.constant 0 : index
    %59 = vector.load %arg10[%c0_18, %c0_19] : memref<16x16xf32, #tpu.memory_space<vmem>>, vector<2x16xf32>
    tpu.vector_store %arg10[%c0_18, %c0_19], %58 {strides = array<i32>} : memref<16x16xf32, #tpu.memory_space<vmem>>, vector<2x16xf32>,
    %60 = vector.extract_strided_slice %57 {offsets = [0, 16], sizes = [2, 16], strides = [1, 1]} : vector<2x32xf32> to vector<2x16xf32>
    %c14 = arith.constant 14 : index
    %c0_20 = arith.constant 0 : index
    %61 = vector.load %arg11[%c14, %c0_20] : memref<16x16xf32, #tpu.memory_space<vmem>>, vector<2x16xf32>
    tpu.vector_store %arg11[%c14, %c0_20], %60 {strides = array<i32>} : memref<16x16xf32, #tpu.memory_space<vmem>>, vector<2x16xf32>,
    %62 = vector.extract_strided_slice %5 {offsets = [2, 0], sizes = [2, 128], strides = [1, 1]} : vector<16x128xf32> to vector<2x128xf32>
    %63 = vector.extract_strided_slice %5 {offsets = [12, 0], sizes = [2, 128], strides = [1, 1]} : vector<16x128xf32> to vector<2x128xf32>
    %64 = arith.select %24, %62, %63 : vector<2x128xi1>, vector<2x128xf32>
    %cst_21 = arith.constant dense<0.000000e+00> : vector<2x128xf32>
    %65 = tpu.matmul %57, %25, %cst_21 {dimension_numbers = #tpu.dot_dimension_numbers<[1], [0], [0], [1], [0, 0, 1, 1], [], []>} : vector<2x32xf32>, vector<32x128xf32>, vector<2x128xf32> -> vector<2x128xf32>
    %66 = arith.addf %64, %65 : vector<2x128xf32>
    %67 = vector.extract_strided_slice %66 {offsets = [0, 0], sizes = [2, 32], strides = [1, 1]} : vector<2x128xf32> to vector<2x32xf32>
    %68 = arith.negf %67 : vector<2x32xf32>
    %69 = math.exp %68 : vector<2x32xf32>
    %cst_22 = arith.constant 1.000000e+00 : f32
    %70 = vector.broadcast %cst_22 : f32 to vector<2x32xf32>
    %71 = arith.addf %70, %69 : vector<2x32xf32>
    %72 = arith.divf %70, %71 : vector<2x32xf32>
    %73 = vector.extract_strided_slice %66 {offsets = [0, 32], sizes = [2, 32], strides = [1, 1]} : vector<2x128xf32> to vector<2x32xf32>
    %74 = arith.negf %73 : vector<2x32xf32>
    %75 = math.exp %74 : vector<2x32xf32>
    %cst_23 = arith.constant 1.000000e+00 : f32
    %76 = vector.broadcast %cst_23 : f32 to vector<2x32xf32>
    %77 = arith.addf %76, %75 : vector<2x32xf32>
    %78 = arith.divf %76, %77 : vector<2x32xf32>
    %79 = vector.extract_strided_slice %66 {offsets = [0, 64], sizes = [2, 32], strides = [1, 1]} : vector<2x128xf32> to vector<2x32xf32>
    %80 = math.tanh %79 : vector<2x32xf32>
    %81 = vector.extract_strided_slice %66 {offsets = [0, 96], sizes = [2, 32], strides = [1, 1]} : vector<2x128xf32> to vector<2x32xf32>
    %82 = arith.negf %81 : vector<2x32xf32>
    %83 = math.exp %82 : vector<2x32xf32>
    %cst_24 = arith.constant 1.000000e+00 : f32
    %84 = vector.broadcast %cst_24 : f32 to vector<2x32xf32>
    %85 = arith.addf %84, %83 : vector<2x32xf32>
    %86 = arith.divf %84, %85 : vector<2x32xf32>
    %87 = arith.mulf %78, %55 : vector<2x32xf32>
    %88 = arith.mulf %72, %80 : vector<2x32xf32>
    %89 = arith.addf %87, %88 : vector<2x32xf32>
    %90 = math.tanh %89 : vector<2x32xf32>
    %91 = arith.mulf %86, %90 : vector<2x32xf32>
    %92 = vector.extract_strided_slice %91 {offsets = [0, 0], sizes = [2, 16], strides = [1, 1]} : vector<2x32xf32> to vector<2x16xf32>
    %c2 = arith.constant 2 : index
    %c0_25 = arith.constant 0 : index
    %93 = vector.load %arg10[%c2, %c0_25] : memref<16x16xf32, #tpu.memory_space<vmem>>, vector<2x16xf32>
    tpu.vector_store %arg10[%c2, %c0_25], %92 {strides = array<i32>} : memref<16x16xf32, #tpu.memory_space<vmem>>, vector<2x16xf32>,
    %94 = vector.extract_strided_slice %91 {offsets = [0, 16], sizes = [2, 16], strides = [1, 1]} : vector<2x32xf32> to vector<2x16xf32>
    %c12 = arith.constant 12 : index
    %c0_26 = arith.constant 0 : index
    %95 = vector.load %arg11[%c12, %c0_26] : memref<16x16xf32, #tpu.memory_space<vmem>>, vector<2x16xf32>
    tpu.vector_store %arg11[%c12, %c0_26], %94 {strides = array<i32>} : memref<16x16xf32, #tpu.memory_space<vmem>>, vector<2x16xf32>,
    %96 = vector.extract_strided_slice %5 {offsets = [4, 0], sizes = [2, 128], strides = [1, 1]} : vector<16x128xf32> to vector<2x128xf32>
    %97 = vector.extract_strided_slice %5 {offsets = [10, 0], sizes = [2, 128], strides = [1, 1]} : vector<16x128xf32> to vector<2x128xf32>
    %98 = arith.select %24, %96, %97 : vector<2x128xi1>, vector<2x128xf32>
    %cst_27 = arith.constant dense<0.000000e+00> : vector<2x128xf32>
    %99 = tpu.matmul %91, %25, %cst_27 {dimension_numbers = #tpu.dot_dimension_numbers<[1], [0], [0], [1], [0, 0, 1, 1], [], []>} : vector<2x32xf32>, vector<32x128xf32>, vector<2x128xf32> -> vector<2x128xf32>
    %100 = arith.addf %98, %99 : vector<2x128xf32>
    %101 = vector.extract_strided_slice %100 {offsets = [0, 0], sizes = [2, 32], strides = [1, 1]} : vector<2x128xf32> to vector<2x32xf32>
    %102 = arith.negf %101 : vector<2x32xf32>
    %103 = math.exp %102 : vector<2x32xf32>
    %cst_28 = arith.constant 1.000000e+00 : f32
    %104 = vector.broadcast %cst_28 : f32 to vector<2x32xf32>
    %105 = arith.addf %104, %103 : vector<2x32xf32>
    %106 = arith.divf %104, %105 : vector<2x32xf32>
    %107 = vector.extract_strided_slice %100 {offsets = [0, 32], sizes = [2, 32], strides = [1, 1]} : vector<2x128xf32> to vector<2x32xf32>
    %108 = arith.negf %107 : vector<2x32xf32>
    %109 = math.exp %108 : vector<2x32xf32>
    %cst_29 = arith.constant 1.000000e+00 : f32
    %110 = vector.broadcast %cst_29 : f32 to vector<2x32xf32>
    %111 = arith.addf %110, %109 : vector<2x32xf32>
    %112 = arith.divf %110, %111 : vector<2x32xf32>
    %113 = vector.extract_strided_slice %100 {offsets = [0, 64], sizes = [2, 32], strides = [1, 1]} : vector<2x128xf32> to vector<2x32xf32>
    %114 = math.tanh %113 : vector<2x32xf32>
    %115 = vector.extract_strided_slice %100 {offsets = [0, 96], sizes = [2, 32], strides = [1, 1]} : vector<2x128xf32> to vector<2x32xf32>
    %116 = arith.negf %115 : vector<2x32xf32>
    %117 = math.exp %116 : vector<2x32xf32>
    %cst_30 = arith.constant 1.000000e+00 : f32
    %118 = vector.broadcast %cst_30 : f32 to vector<2x32xf32>
    %119 = arith.addf %118, %117 : vector<2x32xf32>
    %120 = arith.divf %118, %119 : vector<2x32xf32>
    %121 = arith.mulf %112, %89 : vector<2x32xf32>
    %122 = arith.mulf %106, %114 : vector<2x32xf32>
    %123 = arith.addf %121, %122 : vector<2x32xf32>
    %124 = math.tanh %123 : vector<2x32xf32>
    %125 = arith.mulf %120, %124 : vector<2x32xf32>
    %126 = vector.extract_strided_slice %125 {offsets = [0, 0], sizes = [2, 16], strides = [1, 1]} : vector<2x32xf32> to vector<2x16xf32>
    %c4 = arith.constant 4 : index
    %c0_31 = arith.constant 0 : index
    %127 = vector.load %arg10[%c4, %c0_31] : memref<16x16xf32, #tpu.memory_space<vmem>>, vector<2x16xf32>
    tpu.vector_store %arg10[%c4, %c0_31], %126 {strides = array<i32>} : memref<16x16xf32, #tpu.memory_space<vmem>>, vector<2x16xf32>,
    %128 = vector.extract_strided_slice %125 {offsets = [0, 16], sizes = [2, 16], strides = [1, 1]} : vector<2x32xf32> to vector<2x16xf32>
    %c10 = arith.constant 10 : index
    %c0_32 = arith.constant 0 : index
    %129 = vector.load %arg11[%c10, %c0_32] : memref<16x16xf32, #tpu.memory_space<vmem>>, vector<2x16xf32>
    tpu.vector_store %arg11[%c10, %c0_32], %128 {strides = array<i32>} : memref<16x16xf32, #tpu.memory_space<vmem>>, vector<2x16xf32>,
    %130 = vector.extract_strided_slice %5 {offsets = [6, 0], sizes = [2, 128], strides = [1, 1]} : vector<16x128xf32> to vector<2x128xf32>
    %131 = vector.extract_strided_slice %5 {offsets = [8, 0], sizes = [2, 128], strides = [1, 1]} : vector<16x128xf32> to vector<2x128xf32>
    %132 = arith.select %24, %130, %131 : vector<2x128xi1>, vector<2x128xf32>
    %cst_33 = arith.constant dense<0.000000e+00> : vector<2x128xf32>
    %133 = tpu.matmul %125, %25, %cst_33 {dimension_numbers = #tpu.dot_dimension_numbers<[1], [0], [0], [1], [0, 0, 1, 1], [], []>} : vector<2x32xf32>, vector<32x128xf32>, vector<2x128xf32> -> vector<2x128xf32>
    %134 = arith.addf %132, %133 : vector<2x128xf32>
    %135 = vector.extract_strided_slice %134 {offsets = [0, 0], sizes = [2, 32], strides = [1, 1]} : vector<2x128xf32> to vector<2x32xf32>
    %136 = arith.negf %135 : vector<2x32xf32>
    %137 = math.exp %136 : vector<2x32xf32>
    %cst_34 = arith.constant 1.000000e+00 : f32
    %138 = vector.broadcast %cst_34 : f32 to vector<2x32xf32>
    %139 = arith.addf %138, %137 : vector<2x32xf32>
    %140 = arith.divf %138, %139 : vector<2x32xf32>
    %141 = vector.extract_strided_slice %134 {offsets = [0, 32], sizes = [2, 32], strides = [1, 1]} : vector<2x128xf32> to vector<2x32xf32>
    %142 = arith.negf %141 : vector<2x32xf32>
    %143 = math.exp %142 : vector<2x32xf32>
    %cst_35 = arith.constant 1.000000e+00 : f32
    %144 = vector.broadcast %cst_35 : f32 to vector<2x32xf32>
    %145 = arith.addf %144, %143 : vector<2x32xf32>
    %146 = arith.divf %144, %145 : vector<2x32xf32>
    %147 = vector.extract_strided_slice %134 {offsets = [0, 64], sizes = [2, 32], strides = [1, 1]} : vector<2x128xf32> to vector<2x32xf32>
    %148 = math.tanh %147 : vector<2x32xf32>
    %149 = vector.extract_strided_slice %134 {offsets = [0, 96], sizes = [2, 32], strides = [1, 1]} : vector<2x128xf32> to vector<2x32xf32>
    %150 = arith.negf %149 : vector<2x32xf32>
    %151 = math.exp %150 : vector<2x32xf32>
    %cst_36 = arith.constant 1.000000e+00 : f32
    %152 = vector.broadcast %cst_36 : f32 to vector<2x32xf32>
    %153 = arith.addf %152, %151 : vector<2x32xf32>
    %154 = arith.divf %152, %153 : vector<2x32xf32>
    %155 = arith.mulf %146, %123 : vector<2x32xf32>
    %156 = arith.mulf %140, %148 : vector<2x32xf32>
    %157 = arith.addf %155, %156 : vector<2x32xf32>
    %158 = math.tanh %157 : vector<2x32xf32>
    %159 = arith.mulf %154, %158 : vector<2x32xf32>
    %160 = vector.extract_strided_slice %159 {offsets = [0, 0], sizes = [2, 16], strides = [1, 1]} : vector<2x32xf32> to vector<2x16xf32>
    %c6 = arith.constant 6 : index
    %c0_37 = arith.constant 0 : index
    %161 = vector.load %arg10[%c6, %c0_37] : memref<16x16xf32, #tpu.memory_space<vmem>>, vector<2x16xf32>
    tpu.vector_store %arg10[%c6, %c0_37], %160 {strides = array<i32>} : memref<16x16xf32, #tpu.memory_space<vmem>>, vector<2x16xf32>,
    %162 = vector.extract_strided_slice %159 {offsets = [0, 16], sizes = [2, 16], strides = [1, 1]} : vector<2x32xf32> to vector<2x16xf32>
    %c8 = arith.constant 8 : index
    %c0_38 = arith.constant 0 : index
    %163 = vector.load %arg11[%c8, %c0_38] : memref<16x16xf32, #tpu.memory_space<vmem>>, vector<2x16xf32>
    tpu.vector_store %arg11[%c8, %c0_38], %162 {strides = array<i32>} : memref<16x16xf32, #tpu.memory_space<vmem>>, vector<2x16xf32>,
    %164 = vector.extract_strided_slice %5 {offsets = [8, 0], sizes = [2, 128], strides = [1, 1]} : vector<16x128xf32> to vector<2x128xf32>
    %165 = vector.extract_strided_slice %5 {offsets = [6, 0], sizes = [2, 128], strides = [1, 1]} : vector<16x128xf32> to vector<2x128xf32>
    %166 = arith.select %24, %164, %165 : vector<2x128xi1>, vector<2x128xf32>
    %cst_39 = arith.constant dense<0.000000e+00> : vector<2x128xf32>
    %167 = tpu.matmul %159, %25, %cst_39 {dimension_numbers = #tpu.dot_dimension_numbers<[1], [0], [0], [1], [0, 0, 1, 1], [], []>} : vector<2x32xf32>, vector<32x128xf32>, vector<2x128xf32> -> vector<2x128xf32>
    %168 = arith.addf %166, %167 : vector<2x128xf32>
    %169 = vector.extract_strided_slice %168 {offsets = [0, 0], sizes = [2, 32], strides = [1, 1]} : vector<2x128xf32> to vector<2x32xf32>
    %170 = arith.negf %169 : vector<2x32xf32>
    %171 = math.exp %170 : vector<2x32xf32>
    %cst_40 = arith.constant 1.000000e+00 : f32
    %172 = vector.broadcast %cst_40 : f32 to vector<2x32xf32>
    %173 = arith.addf %172, %171 : vector<2x32xf32>
    %174 = arith.divf %172, %173 : vector<2x32xf32>
    %175 = vector.extract_strided_slice %168 {offsets = [0, 32], sizes = [2, 32], strides = [1, 1]} : vector<2x128xf32> to vector<2x32xf32>
    %176 = arith.negf %175 : vector<2x32xf32>
    %177 = math.exp %176 : vector<2x32xf32>
    %cst_41 = arith.constant 1.000000e+00 : f32
    %178 = vector.broadcast %cst_41 : f32 to vector<2x32xf32>
    %179 = arith.addf %178, %177 : vector<2x32xf32>
    %180 = arith.divf %178, %179 : vector<2x32xf32>
    %181 = vector.extract_strided_slice %168 {offsets = [0, 64], sizes = [2, 32], strides = [1, 1]} : vector<2x128xf32> to vector<2x32xf32>
    %182 = math.tanh %181 : vector<2x32xf32>
    %183 = vector.extract_strided_slice %168 {offsets = [0, 96], sizes = [2, 32], strides = [1, 1]} : vector<2x128xf32> to vector<2x32xf32>
    %184 = arith.negf %183 : vector<2x32xf32>
    %185 = math.exp %184 : vector<2x32xf32>
    %cst_42 = arith.constant 1.000000e+00 : f32
    %186 = vector.broadcast %cst_42 : f32 to vector<2x32xf32>
    %187 = arith.addf %186, %185 : vector<2x32xf32>
    %188 = arith.divf %186, %187 : vector<2x32xf32>
    %189 = arith.mulf %180, %157 : vector<2x32xf32>
    %190 = arith.mulf %174, %182 : vector<2x32xf32>
    %191 = arith.addf %189, %190 : vector<2x32xf32>
    %192 = math.tanh %191 : vector<2x32xf32>
    %193 = arith.mulf %188, %192 : vector<2x32xf32>
    %194 = vector.extract_strided_slice %193 {offsets = [0, 0], sizes = [2, 16], strides = [1, 1]} : vector<2x32xf32> to vector<2x16xf32>
    %c8_43 = arith.constant 8 : index
    %c0_44 = arith.constant 0 : index
    %195 = vector.load %arg10[%c8_43, %c0_44] : memref<16x16xf32, #tpu.memory_space<vmem>>, vector<2x16xf32>
    tpu.vector_store %arg10[%c8_43, %c0_44], %194 {strides = array<i32>} : memref<16x16xf32, #tpu.memory_space<vmem>>, vector<2x16xf32>,
    %196 = vector.extract_strided_slice %193 {offsets = [0, 16], sizes = [2, 16], strides = [1, 1]} : vector<2x32xf32> to vector<2x16xf32>
    %c6_45 = arith.constant 6 : index
    %c0_46 = arith.constant 0 : index
    %197 = vector.load %arg11[%c6_45, %c0_46] : memref<16x16xf32, #tpu.memory_space<vmem>>, vector<2x16xf32>
    tpu.vector_store %arg11[%c6_45, %c0_46], %196 {strides = array<i32>} : memref<16x16xf32, #tpu.memory_space<vmem>>, vector<2x16xf32>,
    %198 = vector.extract_strided_slice %5 {offsets = [10, 0], sizes = [2, 128], strides = [1, 1]} : vector<16x128xf32> to vector<2x128xf32>
    %199 = vector.extract_strided_slice %5 {offsets = [4, 0], sizes = [2, 128], strides = [1, 1]} : vector<16x128xf32> to vector<2x128xf32>
    %200 = arith.select %24, %198, %199 : vector<2x128xi1>, vector<2x128xf32>
    %cst_47 = arith.constant dense<0.000000e+00> : vector<2x128xf32>
    %201 = tpu.matmul %193, %25, %cst_47 {dimension_numbers = #tpu.dot_dimension_numbers<[1], [0], [0], [1], [0, 0, 1, 1], [], []>} : vector<2x32xf32>, vector<32x128xf32>, vector<2x128xf32> -> vector<2x128xf32>
    %202 = arith.addf %200, %201 : vector<2x128xf32>
    %203 = vector.extract_strided_slice %202 {offsets = [0, 0], sizes = [2, 32], strides = [1, 1]} : vector<2x128xf32> to vector<2x32xf32>
    %204 = arith.negf %203 : vector<2x32xf32>
    %205 = math.exp %204 : vector<2x32xf32>
    %cst_48 = arith.constant 1.000000e+00 : f32
    %206 = vector.broadcast %cst_48 : f32 to vector<2x32xf32>
    %207 = arith.addf %206, %205 : vector<2x32xf32>
    %208 = arith.divf %206, %207 : vector<2x32xf32>
    %209 = vector.extract_strided_slice %202 {offsets = [0, 32], sizes = [2, 32], strides = [1, 1]} : vector<2x128xf32> to vector<2x32xf32>
    %210 = arith.negf %209 : vector<2x32xf32>
    %211 = math.exp %210 : vector<2x32xf32>
    %cst_49 = arith.constant 1.000000e+00 : f32
    %212 = vector.broadcast %cst_49 : f32 to vector<2x32xf32>
    %213 = arith.addf %212, %211 : vector<2x32xf32>
    %214 = arith.divf %212, %213 : vector<2x32xf32>
    %215 = vector.extract_strided_slice %202 {offsets = [0, 64], sizes = [2, 32], strides = [1, 1]} : vector<2x128xf32> to vector<2x32xf32>
    %216 = math.tanh %215 : vector<2x32xf32>
    %217 = vector.extract_strided_slice %202 {offsets = [0, 96], sizes = [2, 32], strides = [1, 1]} : vector<2x128xf32> to vector<2x32xf32>
    %218 = arith.negf %217 : vector<2x32xf32>
    %219 = math.exp %218 : vector<2x32xf32>
    %cst_50 = arith.constant 1.000000e+00 : f32
    %220 = vector.broadcast %cst_50 : f32 to vector<2x32xf32>
    %221 = arith.addf %220, %219 : vector<2x32xf32>
    %222 = arith.divf %220, %221 : vector<2x32xf32>
    %223 = arith.mulf %214, %191 : vector<2x32xf32>
    %224 = arith.mulf %208, %216 : vector<2x32xf32>
    %225 = arith.addf %223, %224 : vector<2x32xf32>
    %226 = math.tanh %225 : vector<2x32xf32>
    %227 = arith.mulf %222, %226 : vector<2x32xf32>
    %228 = vector.extract_strided_slice %227 {offsets = [0, 0], sizes = [2, 16], strides = [1, 1]} : vector<2x32xf32> to vector<2x16xf32>
    %c10_51 = arith.constant 10 : index
    %c0_52 = arith.constant 0 : index
    %229 = vector.load %arg10[%c10_51, %c0_52] : memref<16x16xf32, #tpu.memory_space<vmem>>, vector<2x16xf32>
    tpu.vector_store %arg10[%c10_51, %c0_52], %228 {strides = array<i32>} : memref<16x16xf32, #tpu.memory_space<vmem>>, vector<2x16xf32>,
    %230 = vector.extract_strided_slice %227 {offsets = [0, 16], sizes = [2, 16], strides = [1, 1]} : vector<2x32xf32> to vector<2x16xf32>
    %c4_53 = arith.constant 4 : index
    %c0_54 = arith.constant 0 : index
    %231 = vector.load %arg11[%c4_53, %c0_54] : memref<16x16xf32, #tpu.memory_space<vmem>>, vector<2x16xf32>
    tpu.vector_store %arg11[%c4_53, %c0_54], %230 {strides = array<i32>} : memref<16x16xf32, #tpu.memory_space<vmem>>, vector<2x16xf32>,
    %232 = vector.extract_strided_slice %5 {offsets = [12, 0], sizes = [2, 128], strides = [1, 1]} : vector<16x128xf32> to vector<2x128xf32>
    %233 = vector.extract_strided_slice %5 {offsets = [2, 0], sizes = [2, 128], strides = [1, 1]} : vector<16x128xf32> to vector<2x128xf32>
    %234 = arith.select %24, %232, %233 : vector<2x128xi1>, vector<2x128xf32>
    %cst_55 = arith.constant dense<0.000000e+00> : vector<2x128xf32>
    %235 = tpu.matmul %227, %25, %cst_55 {dimension_numbers = #tpu.dot_dimension_numbers<[1], [0], [0], [1], [0, 0, 1, 1], [], []>} : vector<2x32xf32>, vector<32x128xf32>, vector<2x128xf32> -> vector<2x128xf32>
    %236 = arith.addf %234, %235 : vector<2x128xf32>
    %237 = vector.extract_strided_slice %236 {offsets = [0, 0], sizes = [2, 32], strides = [1, 1]} : vector<2x128xf32> to vector<2x32xf32>
    %238 = arith.negf %237 : vector<2x32xf32>
    %239 = math.exp %238 : vector<2x32xf32>
    %cst_56 = arith.constant 1.000000e+00 : f32
    %240 = vector.broadcast %cst_56 : f32 to vector<2x32xf32>
    %241 = arith.addf %240, %239 : vector<2x32xf32>
    %242 = arith.divf %240, %241 : vector<2x32xf32>
    %243 = vector.extract_strided_slice %236 {offsets = [0, 32], sizes = [2, 32], strides = [1, 1]} : vector<2x128xf32> to vector<2x32xf32>
    %244 = arith.negf %243 : vector<2x32xf32>
    %245 = math.exp %244 : vector<2x32xf32>
    %cst_57 = arith.constant 1.000000e+00 : f32
    %246 = vector.broadcast %cst_57 : f32 to vector<2x32xf32>
    %247 = arith.addf %246, %245 : vector<2x32xf32>
    %248 = arith.divf %246, %247 : vector<2x32xf32>
    %249 = vector.extract_strided_slice %236 {offsets = [0, 64], sizes = [2, 32], strides = [1, 1]} : vector<2x128xf32> to vector<2x32xf32>
    %250 = math.tanh %249 : vector<2x32xf32>
    %251 = vector.extract_strided_slice %236 {offsets = [0, 96], sizes = [2, 32], strides = [1, 1]} : vector<2x128xf32> to vector<2x32xf32>
    %252 = arith.negf %251 : vector<2x32xf32>
    %253 = math.exp %252 : vector<2x32xf32>
    %cst_58 = arith.constant 1.000000e+00 : f32
    %254 = vector.broadcast %cst_58 : f32 to vector<2x32xf32>
    %255 = arith.addf %254, %253 : vector<2x32xf32>
    %256 = arith.divf %254, %255 : vector<2x32xf32>
    %257 = arith.mulf %248, %225 : vector<2x32xf32>
    %258 = arith.mulf %242, %250 : vector<2x32xf32>
    %259 = arith.addf %257, %258 : vector<2x32xf32>
    %260 = math.tanh %259 : vector<2x32xf32>
    %261 = arith.mulf %256, %260 : vector<2x32xf32>
    %262 = vector.extract_strided_slice %261 {offsets = [0, 0], sizes = [2, 16], strides = [1, 1]} : vector<2x32xf32> to vector<2x16xf32>
    %c12_59 = arith.constant 12 : index
    %c0_60 = arith.constant 0 : index
    %263 = vector.load %arg10[%c12_59, %c0_60] : memref<16x16xf32, #tpu.memory_space<vmem>>, vector<2x16xf32>
    tpu.vector_store %arg10[%c12_59, %c0_60], %262 {strides = array<i32>} : memref<16x16xf32, #tpu.memory_space<vmem>>, vector<2x16xf32>,
    %264 = vector.extract_strided_slice %261 {offsets = [0, 16], sizes = [2, 16], strides = [1, 1]} : vector<2x32xf32> to vector<2x16xf32>
    %c2_61 = arith.constant 2 : index
    %c0_62 = arith.constant 0 : index
    %265 = vector.load %arg11[%c2_61, %c0_62] : memref<16x16xf32, #tpu.memory_space<vmem>>, vector<2x16xf32>
    tpu.vector_store %arg11[%c2_61, %c0_62], %264 {strides = array<i32>} : memref<16x16xf32, #tpu.memory_space<vmem>>, vector<2x16xf32>,
    %266 = vector.extract_strided_slice %5 {offsets = [14, 0], sizes = [2, 128], strides = [1, 1]} : vector<16x128xf32> to vector<2x128xf32>
    %267 = vector.extract_strided_slice %5 {offsets = [0, 0], sizes = [2, 128], strides = [1, 1]} : vector<16x128xf32> to vector<2x128xf32>
    %268 = arith.select %24, %266, %267 : vector<2x128xi1>, vector<2x128xf32>
    %cst_63 = arith.constant dense<0.000000e+00> : vector<2x128xf32>
    %269 = tpu.matmul %261, %25, %cst_63 {dimension_numbers = #tpu.dot_dimension_numbers<[1], [0], [0], [1], [0, 0, 1, 1], [], []>} : vector<2x32xf32>, vector<32x128xf32>, vector<2x128xf32> -> vector<2x128xf32>
    %270 = arith.addf %268, %269 : vector<2x128xf32>
    %271 = vector.extract_strided_slice %270 {offsets = [0, 0], sizes = [2, 32], strides = [1, 1]} : vector<2x128xf32> to vector<2x32xf32>
    %272 = arith.negf %271 : vector<2x32xf32>
    %273 = math.exp %272 : vector<2x32xf32>
    %cst_64 = arith.constant 1.000000e+00 : f32
    %274 = vector.broadcast %cst_64 : f32 to vector<2x32xf32>
    %275 = arith.addf %274, %273 : vector<2x32xf32>
    %276 = arith.divf %274, %275 : vector<2x32xf32>
    %277 = vector.extract_strided_slice %270 {offsets = [0, 32], sizes = [2, 32], strides = [1, 1]} : vector<2x128xf32> to vector<2x32xf32>
    %278 = arith.negf %277 : vector<2x32xf32>
    %279 = math.exp %278 : vector<2x32xf32>
    %cst_65 = arith.constant 1.000000e+00 : f32
    %280 = vector.broadcast %cst_65 : f32 to vector<2x32xf32>
    %281 = arith.addf %280, %279 : vector<2x32xf32>
    %282 = arith.divf %280, %281 : vector<2x32xf32>
    %283 = vector.extract_strided_slice %270 {offsets = [0, 64], sizes = [2, 32], strides = [1, 1]} : vector<2x128xf32> to vector<2x32xf32>
    %284 = math.tanh %283 : vector<2x32xf32>
    %285 = vector.extract_strided_slice %270 {offsets = [0, 96], sizes = [2, 32], strides = [1, 1]} : vector<2x128xf32> to vector<2x32xf32>
    %286 = arith.negf %285 : vector<2x32xf32>
    %287 = math.exp %286 : vector<2x32xf32>
    %cst_66 = arith.constant 1.000000e+00 : f32
    %288 = vector.broadcast %cst_66 : f32 to vector<2x32xf32>
    %289 = arith.addf %288, %287 : vector<2x32xf32>
    %290 = arith.divf %288, %289 : vector<2x32xf32>
    %291 = arith.mulf %282, %259 : vector<2x32xf32>
    %292 = arith.mulf %276, %284 : vector<2x32xf32>
    %293 = arith.addf %291, %292 : vector<2x32xf32>
    %294 = math.tanh %293 : vector<2x32xf32>
    %295 = arith.mulf %290, %294 : vector<2x32xf32>
    %296 = vector.extract_strided_slice %295 {offsets = [0, 0], sizes = [2, 16], strides = [1, 1]} : vector<2x32xf32> to vector<2x16xf32>
    %c14_67 = arith.constant 14 : index
    %c0_68 = arith.constant 0 : index
    %297 = vector.load %arg10[%c14_67, %c0_68] : memref<16x16xf32, #tpu.memory_space<vmem>>, vector<2x16xf32>
    tpu.vector_store %arg10[%c14_67, %c0_68], %296 {strides = array<i32>} : memref<16x16xf32, #tpu.memory_space<vmem>>, vector<2x16xf32>,
    %298 = vector.extract_strided_slice %295 {offsets = [0, 16], sizes = [2, 16], strides = [1, 1]} : vector<2x32xf32> to vector<2x16xf32>
    %c0_69 = arith.constant 0 : index
    %c0_70 = arith.constant 0 : index
    %299 = vector.load %arg11[%c0_69, %c0_70] : memref<16x16xf32, #tpu.memory_space<vmem>>, vector<2x16xf32>
    tpu.vector_store %arg11[%c0_69, %c0_70], %298 {strides = array<i32>} : memref<16x16xf32, #tpu.memory_space<vmem>>, vector<2x16xf32>,
    %c0_71 = arith.constant 0 : index
    %c0_72 = arith.constant 0 : index
    %300 = vector.load %arg7[%c0_71, %c0_72] : memref<32x8xf32, #tpu.memory_space<vmem>>, vector<32x8xf32>
    %c0_73 = arith.constant 0 : index
    %c0_74 = arith.constant 0 : index
    %301 = vector.load %arg10[%c0_73, %c0_74] : memref<16x16xf32, #tpu.memory_space<vmem>>, vector<16x16xf32>
    %302 = vector.extract_strided_slice %300 {offsets = [0, 0], sizes = [16, 8], strides = [1, 1]} : vector<32x8xf32> to vector<16x8xf32>
    %cst_75 = arith.constant dense<0.000000e+00> : vector<16x8xf32>
    %303 = tpu.matmul %301, %302, %cst_75 {dimension_numbers = #tpu.dot_dimension_numbers<[1], [0], [0], [1], [0, 0, 1, 1], [], []>} : vector<16x16xf32>, vector<16x8xf32>, vector<16x8xf32> -> vector<16x8xf32>
    %c0_76 = arith.constant 0 : index
    %c0_77 = arith.constant 0 : index
    %304 = vector.load %arg11[%c0_76, %c0_77] : memref<16x16xf32, #tpu.memory_space<vmem>>, vector<16x16xf32>
    %305 = vector.extract_strided_slice %300 {offsets = [16, 0], sizes = [16, 8], strides = [1, 1]} : vector<32x8xf32> to vector<16x8xf32>
    %cst_78 = arith.constant dense<0.000000e+00> : vector<16x8xf32>
    %306 = tpu.matmul %304, %305, %cst_78 {dimension_numbers = #tpu.dot_dimension_numbers<[1], [0], [0], [1], [0, 0, 1, 1], [], []>} : vector<16x16xf32>, vector<16x8xf32>, vector<16x8xf32> -> vector<16x8xf32>
    %307 = arith.addf %303, %306 : vector<16x8xf32>
    %c0_79 = arith.constant 0 : index
    %c0_80 = arith.constant 0 : index
    %308 = vector.load %arg8[%c0_79, %c0_80] : memref<1x8xf32, #tpu.memory_space<vmem>>, vector<1x8xf32>
    %309 = vector.broadcast %308 : vector<1x8xf32> to vector<16x8xf32>
    %310 = arith.addf %307, %309 : vector<16x8xf32>
    %c0_81 = arith.constant 0 : index
    %c0_82 = arith.constant 0 : index
    %311 = vector.load %arg9[%c0_81, %c0_82] : memref<16x8xf32, #tpu.memory_space<vmem>>, vector<16x8xf32>
    tpu.vector_store %arg9[%c0_81, %c0_82], %310 {strides = array<i32>} : memref<16x8xf32, #tpu.memory_space<vmem>>, vector<16x8xf32>,
    return
  }
  func.func @transform_0(%arg0: i32) -> (i32, i32) {
    %c0_i32 = arith.constant 0 : i32
    %c0_i32_0 = arith.constant 0 : i32
    %c0_i32_1 = arith.constant 0 : i32
    return %c0_i32, %c0_i32_0 : i32, i32
  }
  func.func @transform_1(%arg0: i32) -> (i32, i32) {
    %c0_i32 = arith.constant 0 : i32
    %c0_i32_0 = arith.constant 0 : i32
    %c0_i32_1 = arith.constant 0 : i32
    return %c0_i32, %c0_i32_0 : i32, i32
  }
  func.func @transform_2(%arg0: i32) -> (i32, i32) {
    %c0_i32 = arith.constant 0 : i32
    %c0_i32_0 = arith.constant 0 : i32
    %c0_i32_1 = arith.constant 0 : i32
    return %c0_i32, %c0_i32_0 : i32, i32
  }
  func.func @transform_3(%arg0: i32) -> (i32, i32) {
    %c0_i32 = arith.constant 0 : i32
    %c0_i32_0 = arith.constant 0 : i32
    %c0_i32_1 = arith.constant 0 : i32
    return %c0_i32, %c0_i32_0 : i32, i32
  }
  func.func @transform_4(%arg0: i32) -> (i32, i32) {
    %c0_i32 = arith.constant 0 : i32
    %c0_i32_0 = arith.constant 0 : i32
    %c0_i32_1 = arith.constant 0 : i32
    return %c0_i32, %c0_i32_0 : i32, i32
  }
  func.func @transform_5(%arg0: i32) -> (i32, i32) {
    %c0_i32 = arith.constant 0 : i32
    %c0_i32_0 = arith.constant 0 : i32
    %c0_i32_1 = arith.constant 0 : i32
    return %c0_i32, %c0_i32_0 : i32, i32
  }
  func.func @transform_6(%arg0: i32) -> (i32, i32) {
    %c0_i32 = arith.constant 0 : i32
    %c0_i32_0 = arith.constant 0 : i32
    %c0_i32_1 = arith.constant 0 : i32
    return %c0_i32, %c0_i32_0 : i32, i32
  }
  func.func @transform_7(%arg0: i32) -> (i32, i32) {
    %c0_i32 = arith.constant 0 : i32
    %c0_i32_0 = arith.constant 0 : i32
    %c0_i32_1 = arith.constant 0 : i32
    return %c0_i32, %c0_i32_0 : i32, i32
  }
  func.func @transform_8(%arg0: i32) -> (i32, i32) {
    %c0_i32 = arith.constant 0 : i32
    %c0_i32_0 = arith.constant 0 : i32
    %c0_i32_1 = arith.constant 0 : i32
    return %c0_i32, %c0_i32_0 : i32, i32
  }
}

</mosaic_0001>

<llo_original>
// kernel: rnn_labeler_forward.1
$region0: #{rnn_labeler_forward.1}
  #allocation0 [shape = 'u32[]', space=smem, size = 0x4, offset = 0x4, fixed_abs, tag = 'smem constant byte address 0x4 - core index']
  #allocation1 [shape = 'u32[144,128]{1,0:T(1,128)}', space=vmem, size = 0x12000, scoped, tag = 'internal scratch']
  #allocation2 [shape = 'f32[16,16]{1,0:T(8,128)}', space=vmem, size = 0x2000, scoped, tag = 'scratch operand']
  #allocation3 [shape = 'f32[16,16]{1,0:T(8,128)}', space=vmem, size = 0x2000, scoped, tag = 'scratch operand']
  %s0 = inlined_call_operand.vmem [shape: f32[16,32], index: 0, kind: input, shape index: {}]
  %s1 = inlined_call_operand.vmem [shape: f32[32,128], index: 1, kind: input, shape index: {}]
  %s2 = inlined_call_operand.vmem [shape: f32[32,128], index: 2, kind: input, shape index: {}]
  %s3 = inlined_call_operand.vmem [shape: f32[1,128], index: 3, kind: input, shape index: {}]
  %s4 = inlined_call_operand.vmem [shape: f32[2,32], index: 4, kind: input, shape index: {}]
  %s5 = inlined_call_operand.vmem [shape: f32[2,32], index: 5, kind: input, shape index: {}]
  %s6 = inlined_call_operand.vmem [shape: f32[32,8], index: 6, kind: input, shape index: {}]
  %s7 = inlined_call_operand.vmem [shape: f32[1,8], index: 7, kind: input, shape index: {}]
  %s8 = inlined_call_operand.vmem [shape: f32[16,8], index: 8, kind: output, shape index: {}]
  %s9 = sld [smem:[#allocation0]]
  $region42: #{rnn_labeler_forward.1} parent=0
    _
  %s11 = ssub.s32 1, %s9
  %s12 = scalar_select 0, %s11, %s9
  // Predicated region
  $region2: #{rnn_labeler_forward.1} parent=0 // pred_check
    _
  $region3: #{rnn_labeler_forward.1} parent=0 // pred_check_branch
    %14 = sbr.rel (0) target = $region5
  $region4: #{rnn_labeler_forward.1} parent=0 // pred_region
    _
  $region5: #{rnn_labeler_forward.1} parent=0 // pred_fallthru
    _
  // Predicated region
  $region6: #{rnn_labeler_forward.1} parent=0 // pred_check
    _
  $region7: #{rnn_labeler_forward.1} parent=0 // pred_check_branch
    %16 = sbr.rel (0) target = $region9
  $region8: #{rnn_labeler_forward.1} parent=0 // pred_region
    _
  $region9: #{rnn_labeler_forward.1} parent=0 // pred_fallthru
    _
  // Predicated region
  $region10: #{rnn_labeler_forward.1} parent=0 // pred_check
    _
  $region11: #{rnn_labeler_forward.1} parent=0 // pred_check_branch
    %18 = sbr.rel (0) target = $region13
  $region12: #{rnn_labeler_forward.1} parent=0 // pred_region
    _
  $region13: #{rnn_labeler_forward.1} parent=0 // pred_fallthru
    _
  // Predicated region
  $region14: #{rnn_labeler_forward.1} parent=0 // pred_check
    _
  $region15: #{rnn_labeler_forward.1} parent=0 // pred_check_branch
    %20 = sbr.rel (0) target = $region17
  $region16: #{rnn_labeler_forward.1} parent=0 // pred_region
    _
  $region17: #{rnn_labeler_forward.1} parent=0 // pred_fallthru
    _
  // Predicated region
  $region18: #{rnn_labeler_forward.1} parent=0 // pred_check
    _
  $region19: #{rnn_labeler_forward.1} parent=0 // pred_check_branch
    %22 = sbr.rel (0) target = $region21
  $region20: #{rnn_labeler_forward.1} parent=0 // pred_region
    _
  $region21: #{rnn_labeler_forward.1} parent=0 // pred_fallthru
    _
  // Predicated region
  $region22: #{rnn_labeler_forward.1} parent=0 // pred_check
    _
  $region23: #{rnn_labeler_forward.1} parent=0 // pred_check_branch
    %24 = sbr.rel (0) target = $region25
  $region24: #{rnn_labeler_forward.1} parent=0 // pred_region
    _
  $region25: #{rnn_labeler_forward.1} parent=0 // pred_fallthru
    _
  // Predicated region
  $region26: #{rnn_labeler_forward.1} parent=0 // pred_check
    _
  $region27: #{rnn_labeler_forward.1} parent=0 // pred_check_branch
    %26 = sbr.rel (0) target = $region29
  $region28: #{rnn_labeler_forward.1} parent=0 // pred_region
    _
  $region29: #{rnn_labeler_forward.1} parent=0 // pred_fallthru
    _
  // Predicated region
  $region30: #{rnn_labeler_forward.1} parent=0 // pred_check
    _
  $region31: #{rnn_labeler_forward.1} parent=0 // pred_check_branch
    %28 = sbr.rel (0) target = $region33
  $region32: #{rnn_labeler_forward.1} parent=0 // pred_region
    _
  $region33: #{rnn_labeler_forward.1} parent=0 // pred_fallthru
    _
  %v29 = vld [vmem:[%s0] sm:$0xff]
  %v30 = vld [vmem:[%s0 + $0x8] sm:$0xff]
  %v31 = vld [vmem:[%s1] sm:$0xff]
  %v32 = vld [vmem:[%s1 + $0x8] sm:$0xff]
  %v33 = vld [vmem:[%s1 + $0x10] sm:$0xff]
  %v34 = vld [vmem:[%s1 + $0x18] sm:$0xff]
  %v35 = vld [vmem:[%s3] sm:$0x1]
  %v37 = vlaneseq
  %v38 = vshrl.u32 %v37, 7
  %v39 = vsub.s32 0, %v38
  %v40 = vrot.slane %v35, %v39
  %vm42 = vcmask 261120
  %v44 = vsel %vm42, %v29, 0
  %v47 = vsel %vm42, %v30, 0
  %49 = vmatprep.subr.mxu0 0.0
  %50 = vmatpush1.msra.mxu0 0.0
  %51 = vmatprep.subr.mxu0 0.0
  %52 = vmatpush1.msra.mxu0 0.0
  %53 = vmatprep.subr.mxu0 0.0
  %54 = vmatpush1.msra.mxu0 0.0
  %55 = vmatprep.subr.mxu0 0.0
  %56 = vmatpush1.msra.mxu0 0.0
  %57 = vmatprep.subr.mxu0 0.0
  %58 = vmatpush1.msra.mxu0 0.0
  %59 = vmatprep.subr.mxu0 0.0
  %60 = vmatpush1.msra.mxu0 0.0
  %61 = vmatprep.subr.mxu0 0.0
  %62 = vmatpush1.msra.mxu0 0.0
  %63 = vmatprep.subr.mxu0 0.0
  %64 = vmatpush1.msra.mxu0 0.0
  %65 = vmatprep.subr.mxu0 0.0
  %66 = vmatpush1.msra.mxu0 0.0
  %67 = vmatprep.subr.mxu0 0.0
  %68 = vmatpush1.msra.mxu0 0.0
  %69 = vmatprep.subr.mxu0 0.0
  %70 = vmatpush1.msra.mxu0 0.0
  %71 = vmatprep.subr.mxu0 0.0
  %72 = vmatpush1.msra.mxu0 0.0
  %73 = vmatprep.subr.mxu0 0.0
  %74 = vmatpush1.msra.mxu0 %v34
  %75 = vmatprep.subr.mxu0 0.0
  %76 = vmatpush1.msra.mxu0 %v33
  %77 = vmatprep.subr.mxu0 0.0
  %78 = vmatpush1.msra.mxu0 %v32
  %79 = vmatprep.subr.mxu0 0.0
  %80 = vmatpush1.msra.mxu0 %v31
  %81 = vmatprep.subr.mxu0 0.0
  %82 = vmatpush2.msra.mxu0 0.0
  %83 = vmatprep.subr.mxu0 0.0
  %84 = vmatpush2.msra.mxu0 0.0
  %85 = vmatprep.subr.mxu0 0.0
  %86 = vmatpush2.msra.mxu0 0.0
  %87 = vmatprep.subr.mxu0 0.0
  %88 = vmatpush2.msra.mxu0 0.0
  %89 = vmatprep.subr.mxu0 0.0
  %90 = vmatpush2.msra.mxu0 0.0
  %91 = vmatprep.subr.mxu0 0.0
  %92 = vmatpush2.msra.mxu0 0.0
  %93 = vmatprep.subr.mxu0 0.0
  %94 = vmatpush2.msra.mxu0 0.0
  %95 = vmatprep.subr.mxu0 0.0
  %96 = vmatpush2.msra.mxu0 0.0
  %97 = vmatprep.subr.mxu0 0.0
  %98 = vmatpush2.msra.mxu0 0.0
  %99 = vmatprep.subr.mxu0 0.0
  %100 = vmatpush2.msra.mxu0 0.0
  %101 = vmatprep.subr.mxu0 0.0
  %102 = vmatpush2.msra.mxu0 0.0
  %103 = vmatprep.subr.mxu0 0.0
  %104 = vmatpush2.msra.mxu0 0.0
  %105 = vmatprep.subr.mxu0 0.0
  %106 = vmatpush2.msra.mxu0 0.0
  %107 = vmatprep.subr.mxu0 0.0
  %108 = vmatpush2.msra.mxu0 0.0
  %109 = vmatprep.subr.mxu0 0.0
  %110 = vmatpush2.msra.mxu0 0.0
  %111 = vmatprep.subr.mxu0 0.0
  %112 = vmatpush2.msra.mxu0 0.0
  %113 = vmatprep.mubr.f32.mxu0 0.0
  %114 = vmatmul.mubr.f32.gmra.mxu0 %v44
  %v115 = vpop.f32.mrf.mxu0
  %v116 = vadd.f32 %v40, %v115
  %v117 = vpop.f32.mrf.mxu0
  %118 = vmatprep.mubr.f32.mxu0 0.0
  %119 = vmatmul.mubr.f32.gmra.mxu0 %v47
  %v120 = vpop.f32.mrf.mxu0
  %v121 = vadd.f32 %v40, %v120
  %v122 = vpop.f32.mrf.mxu0
  %123 = vdwg.mxu0
  %v124 = vlaneseq
  %v125 = vand.u32 %v124, 127
  %vm126 = vcmp.lt.s32.totalorder %v125, 0
  %v127 = vsub.s32 0, %v125
  %v128 = vsel %vm126, %v127, %v125
  %v129 = vshrl.u32 %v128, 5
  %v130 = vand.u32 %v128, 31
  %v131 = vsub.s32 0, %v130
  %v132 = vsel %vm126, %v131, %v130
  %vm133 = vcmp.ne.s32.totalorder %v132, 0
  %vm134 = vcmp.lt.s32.totalorder %v132, 0
  %vm135 = vmand %vm134, %vm133
  %v136 = vadd.s32 %v132, 32
  %v137 = vsel %vm135, %v136, %v132
  %vm138 = vcmp.lt.s32.totalorder %v137, 16
  %v139 = vld [vmem:[%s2] sm:$0xff]
  %v140 = vld [vmem:[%s2 + $0x8] sm:$0xff]
  %v141 = vld [vmem:[%s2 + $0x10] sm:$0xff]
  %v142 = vld [vmem:[%s2 + $0x18] sm:$0xff]
  %v143 = vld [vmem:[%s4] sm:$0x3]
  %v144 = vld [vmem:[%s5] sm:$0x3]
  %v146 = vrot.slane %v121, 6
  %v148 = vsel %vm138, %v116, %v146
  %v150 = vsel %vm42, %v143, 0
  %152 = vmatprep.subr.mxu0 0.0
  %153 = vmatpush1.msra.mxu0 0.0
  %154 = vmatprep.subr.mxu0 0.0
  %155 = vmatpush1.msra.mxu0 0.0
  %156 = vmatprep.subr.mxu0 0.0
  %157 = vmatpush1.msra.mxu0 0.0
  %158 = vmatprep.subr.mxu0 0.0
  %159 = vmatpush1.msra.mxu0 0.0
  %160 = vmatprep.subr.mxu0 0.0
  %161 = vmatpush1.msra.mxu0 0.0
  %162 = vmatprep.subr.mxu0 0.0
  %163 = vmatpush1.msra.mxu0 0.0
  %164 = vmatprep.subr.mxu0 0.0
  %165 = vmatpush1.msra.mxu0 0.0
  %166 = vmatprep.subr.mxu0 0.0
  %167 = vmatpush1.msra.mxu0 0.0
  %168 = vmatprep.subr.mxu0 0.0
  %169 = vmatpush1.msra.mxu0 0.0
  %170 = vmatprep.subr.mxu0 0.0
  %171 = vmatpush1.msra.mxu0 0.0
  %172 = vmatprep.subr.mxu0 0.0
  %173 = vmatpush1.msra.mxu0 0.0
  %174 = vmatprep.subr.mxu0 0.0
  %175 = vmatpush1.msra.mxu0 0.0
  %176 = vmatprep.subr.mxu0 0.0
  %177 = vmatpush1.msra.mxu0 %v142
  %178 = vmatprep.subr.mxu0 0.0
  %179 = vmatpush1.msra.mxu0 %v141
  %180 = vmatprep.subr.mxu0 0.0
  %181 = vmatpush1.msra.mxu0 %v140
  %182 = vmatprep.subr.mxu0 0.0
  %183 = vmatpush1.msra.mxu0 %v139
  %184 = vmatprep.subr.mxu0 0.0
  %185 = vmatpush2.msra.mxu0 0.0
  %186 = vmatprep.subr.mxu0 0.0
  %187 = vmatpush2.msra.mxu0 0.0
  %188 = vmatprep.subr.mxu0 0.0
  %189 = vmatpush2.msra.mxu0 0.0
  %190 = vmatprep.subr.mxu0 0.0
  %191 = vmatpush2.msra.mxu0 0.0
  %192 = vmatprep.subr.mxu0 0.0
  %193 = vmatpush2.msra.mxu0 0.0
  %194 = vmatprep.subr.mxu0 0.0
  %195 = vmatpush2.msra.mxu0 0.0
  %196 = vmatprep.subr.mxu0 0.0
  %197 = vmatpush2.msra.mxu0 0.0
  %198 = vmatprep.subr.mxu0 0.0
  %199 = vmatpush2.msra.mxu0 0.0
  %200 = vmatprep.subr.mxu0 0.0
  %201 = vmatpush2.msra.mxu0 0.0
  %202 = vmatprep.subr.mxu0 0.0
  %203 = vmatpush2.msra.mxu0 0.0
  %204 = vmatprep.subr.mxu0 0.0
  %205 = vmatpush2.msra.mxu0 0.0
  %206 = vmatprep.subr.mxu0 0.0
  %207 = vmatpush2.msra.mxu0 0.0
  %208 = vmatprep.subr.mxu0 0.0
  %209 = vmatpush2.msra.mxu0 0.0
  %210 = vmatprep.subr.mxu0 0.0
  %211 = vmatpush2.msra.mxu0 0.0
  %212 = vmatprep.subr.mxu0 0.0
  %213 = vmatpush2.msra.mxu0 0.0
  %214 = vmatprep.subr.mxu0 0.0
  %215 = vmatpush2.msra.mxu0 0.0
  %216 = vmatprep.mubr.f32.mxu0 0.0
  %217 = vmatmul.mubr.f32.gmra.mxu0 %v150
  %v218 = vpop.f32.mrf.mxu0
  %v219 = vadd.f32 0.0, %v218
  %v220 = vpop.f32.mrf.mxu0
  %221 = vdwg.mxu0
  %v222 = vadd.f32 %v148, %v219
  %v223 = vxor.u32 %v222, 2147483648
  %v224 = vmul.f32 %v223, 1.442695
  %v225 = vpow.pop %v224
  %v226 = vadd.f32 %v225, 1.0
  %v227 = vrcp.pop %v226
  %v228 = vmul.f32 1.0, %v227
  %v229 = vtanh.pop %v222
  %231 = vrot.lane.b32.xlu0 %v144, 32
  %v232 = vpop.permute.xlu0 %231
  %v234 = vmul.f32 %v228, %v232
  %236 = vrot.lane.b32.xlu0 %v229, 64
  %v237 = vpop.permute.xlu0 %236
  %v239 = vmul.f32 %v228, %v237
  %241 = vrot.lane.b32.xlu0 %v239, 32
  %v242 = vpop.permute.xlu0 %241
  %v244 = vadd.f32 %v234, %v242
  %v245 = vtanh.pop %v244
  %247 = vrot.lane.b32.xlu0 %v245, 64
  %v248 = vpop.permute.xlu0 %247
  %v250 = vmul.f32 %v228, %v248
  %252 = vrot.lane.b32.xlu0 %v250, 32
  %v253 = vpop.permute.xlu0 %252
  %vm255 = vcmask 123904
  %256 = vst.msk [vmem:[#allocation2] sm:$0x3] %vm255, %v253
  %257 = vrot.lane.b32.xlu0 %v250, 16
  %v258 = vpop.permute.xlu0 %257
  %260 = vst.msk [vmem:[#allocation3 + $0xe] sm:$0x3] %vm255, %v258
  %v261 = vrot.slane %v121, 2
  %v263 = vsel %vm138, %v116, %v261
  %v264 = vsel %vm42, %v253, 0
  %266 = vmatprep.subr.mxu0 0.0
  %267 = vmatpush1.msra.mxu0 0.0
  %268 = vmatprep.subr.mxu0 0.0
  %269 = vmatpush1.msra.mxu0 0.0
  %270 = vmatprep.subr.mxu0 0.0
  %271 = vmatpush1.msra.mxu0 0.0
  %272 = vmatprep.subr.mxu0 0.0
  %273 = vmatpush1.msra.mxu0 0.0
  %274 = vmatprep.subr.mxu0 0.0
  %275 = vmatpush1.msra.mxu0 0.0
  %276 = vmatprep.subr.mxu0 0.0
  %277 = vmatpush1.msra.mxu0 0.0
  %278 = vmatprep.subr.mxu0 0.0
  %279 = vmatpush1.msra.mxu0 0.0
  %280 = vmatprep.subr.mxu0 0.0
  %281 = vmatpush1.msra.mxu0 0.0
  %282 = vmatprep.subr.mxu0 0.0
  %283 = vmatpush1.msra.mxu0 0.0
  %284 = vmatprep.subr.mxu0 0.0
  %285 = vmatpush1.msra.mxu0 0.0
  %286 = vmatprep.subr.mxu0 0.0
  %287 = vmatpush1.msra.mxu0 0.0
  %288 = vmatprep.subr.mxu0 0.0
  %289 = vmatpush1.msra.mxu0 0.0
  %290 = vmatprep.subr.mxu0 0.0
  %291 = vmatpush1.msra.mxu0 %v142
  %292 = vmatprep.subr.mxu0 0.0
  %293 = vmatpush1.msra.mxu0 %v141
  %294 = vmatprep.subr.mxu0 0.0
  %295 = vmatpush1.msra.mxu0 %v140
  %296 = vmatprep.subr.mxu0 0.0
  %297 = vmatpush1.msra.mxu0 %v139
  %298 = vmatprep.subr.mxu0 0.0
  %299 = vmatpush2.msra.mxu0 0.0
  %300 = vmatprep.subr.mxu0 0.0
  %301 = vmatpush2.msra.mxu0 0.0
  %302 = vmatprep.subr.mxu0 0.0
  %303 = vmatpush2.msra.mxu0 0.0
  %304 = vmatprep.subr.mxu0 0.0
  %305 = vmatpush2.msra.mxu0 0.0
  %306 = vmatprep.subr.mxu0 0.0
  %307 = vmatpush2.msra.mxu0 0.0
  %308 = vmatprep.subr.mxu0 0.0
  %309 = vmatpush2.msra.mxu0 0.0
  %310 = vmatprep.subr.mxu0 0.0
  %311 = vmatpush2.msra.mxu0 0.0
  %312 = vmatprep.subr.mxu0 0.0
  %313 = vmatpush2.msra.mxu0 0.0
  %314 = vmatprep.subr.mxu0 0.0
  %315 = vmatpush2.msra.mxu0 0.0
  %316 = vmatprep.subr.mxu0 0.0
  %317 = vmatpush2.msra.mxu0 0.0
  %318 = vmatprep.subr.mxu0 0.0
  %319 = vmatpush2.msra.mxu0 0.0
  %320 = vmatprep.subr.mxu0 0.0
  %321 = vmatpush2.msra.mxu0 0.0
  %322 = vmatprep.subr.mxu0 0.0
  %323 = vmatpush2.msra.mxu0 0.0
  %324 = vmatprep.subr.mxu0 0.0
  %325 = vmatpush2.msra.mxu0 0.0
  %326 = vmatprep.subr.mxu0 0.0
  %327 = vmatpush2.msra.mxu0 0.0
  %328 = vmatprep.subr.mxu0 0.0
  %329 = vmatpush2.msra.mxu0 0.0
  %330 = vmatprep.mubr.f32.mxu0 0.0
  %331 = vmatmul.mubr.f32.gmra.mxu0 %v264
  %v332 = vpop.f32.mrf.mxu0
  %v333 = vadd.f32 0.0, %v332
  %v334 = vpop.f32.mrf.mxu0
  %335 = vdwg.mxu0
  %v337 = vrot.slane %v333, 6
  %v339 = vadd.f32 %v263, %v337
  %v340 = vxor.u32 %v339, 2147483648
  %v341 = vmul.f32 %v340, 1.442695
  %v342 = vpow.pop %v341
  %v343 = vadd.f32 %v342, 1.0
  %v344 = vrcp.pop %v343
  %v345 = vmul.f32 1.0, %v344
  %v346 = vtanh.pop %v339
  %v348 = vrot.slane %v244, 6
  %v350 = vmul.f32 %v345, %v348
  %352 = vrot.lane.b32.xlu0 %v346, 64
  %v353 = vpop.permute.xlu0 %352
  %v355 = vmul.f32 %v345, %v353
  %357 = vrot.lane.b32.xlu0 %v355, 32
  %v358 = vpop.permute.xlu0 %357
  %v360 = vadd.f32 %v350, %v358
  %v361 = vtanh.pop %v360
  %363 = vrot.lane.b32.xlu0 %v361, 64
  %v364 = vpop.permute.xlu0 %363
  %v366 = vmul.f32 %v345, %v364
  %368 = vrot.lane.b32.xlu0 %v366, 32
  %v369 = vpop.permute.xlu0 %368
  %vm371 = vcmask 125954
  %372 = vst.msk [vmem:[#allocation2] sm:$0xc] %vm371, %v369
  %373 = vrot.lane.b32.xlu0 %v366, 16
  %v374 = vpop.permute.xlu0 %373
  %376 = vst.msk [vmem:[#allocation3 + $0xa] sm:$0xc] %vm371, %v374
  %v377 = vrot.slane %v366, 2
  %378 = vrot.lane.b32.xlu0 %v377, 32
  %v379 = vpop.permute.xlu0 %378
  %v380 = vsel %vm42, %v379, 0
  %382 = vmatprep.subr.mxu0 0.0
  %383 = vmatpush1.msra.mxu0 0.0
  %384 = vmatprep.subr.mxu0 0.0
  %385 = vmatpush1.msra.mxu0 0.0
  %386 = vmatprep.subr.mxu0 0.0
  %387 = vmatpush1.msra.mxu0 0.0
  %388 = vmatprep.subr.mxu0 0.0
  %389 = vmatpush1.msra.mxu0 0.0
  %390 = vmatprep.subr.mxu0 0.0
  %391 = vmatpush1.msra.mxu0 0.0
  %392 = vmatprep.subr.mxu0 0.0
  %393 = vmatpush1.msra.mxu0 0.0
  %394 = vmatprep.subr.mxu0 0.0
  %395 = vmatpush1.msra.mxu0 0.0
  %396 = vmatprep.subr.mxu0 0.0
  %397 = vmatpush1.msra.mxu0 0.0
  %398 = vmatprep.subr.mxu0 0.0
  %399 = vmatpush1.msra.mxu0 0.0
  %400 = vmatprep.subr.mxu0 0.0
  %401 = vmatpush1.msra.mxu0 0.0
  %402 = vmatprep.subr.mxu0 0.0
  %403 = vmatpush1.msra.mxu0 0.0
  %404 = vmatprep.subr.mxu0 0.0
  %405 = vmatpush1.msra.mxu0 0.0
  %406 = vmatprep.subr.mxu0 0.0
  %407 = vmatpush1.msra.mxu0 %v142
  %408 = vmatprep.subr.mxu0 0.0
  %409 = vmatpush1.msra.mxu0 %v141
  %410 = vmatprep.subr.mxu0 0.0
  %411 = vmatpush1.msra.mxu0 %v140
  %412 = vmatprep.subr.mxu0 0.0
  %413 = vmatpush1.msra.mxu0 %v139
  %414 = vmatprep.subr.mxu0 0.0
  %415 = vmatpush2.msra.mxu0 0.0
  %416 = vmatprep.subr.mxu0 0.0
  %417 = vmatpush2.msra.mxu0 0.0
  %418 = vmatprep.subr.mxu0 0.0
  %419 = vmatpush2.msra.mxu0 0.0
  %420 = vmatprep.subr.mxu0 0.0
  %421 = vmatpush2.msra.mxu0 0.0
  %422 = vmatprep.subr.mxu0 0.0
  %423 = vmatpush2.msra.mxu0 0.0
  %424 = vmatprep.subr.mxu0 0.0
  %425 = vmatpush2.msra.mxu0 0.0
  %426 = vmatprep.subr.mxu0 0.0
  %427 = vmatpush2.msra.mxu0 0.0
  %428 = vmatprep.subr.mxu0 0.0
  %429 = vmatpush2.msra.mxu0 0.0
  %430 = vmatprep.subr.mxu0 0.0
  %431 = vmatpush2.msra.mxu0 0.0
  %432 = vmatprep.subr.mxu0 0.0
  %433 = vmatpush2.msra.mxu0 0.0
  %434 = vmatprep.subr.mxu0 0.0
  %435 = vmatpush2.msra.mxu0 0.0
  %436 = vmatprep.subr.mxu0 0.0
  %437 = vmatpush2.msra.mxu0 0.0
  %438 = vmatprep.subr.mxu0 0.0
  %439 = vmatpush2.msra.mxu0 0.0
  %440 = vmatprep.subr.mxu0 0.0
  %441 = vmatpush2.msra.mxu0 0.0
  %442 = vmatprep.subr.mxu0 0.0
  %443 = vmatpush2.msra.mxu0 0.0
  %444 = vmatprep.subr.mxu0 0.0
  %445 = vmatpush2.msra.mxu0 0.0
  %446 = vmatprep.mubr.f32.mxu0 0.0
  %447 = vmatmul.mubr.f32.gmra.mxu0 %v380
  %v448 = vpop.f32.mrf.mxu0
  %v449 = vadd.f32 0.0, %v448
  %v450 = vpop.f32.mrf.mxu0
  %451 = vdwg.mxu0
  %v453 = vrot.slane %v449, 4
  %v455 = vadd.f32 %v148, %v453
  %v456 = vxor.u32 %v455, 2147483648
  %v457 = vmul.f32 %v456, 1.442695
  %v458 = vpow.pop %v457
  %v459 = vadd.f32 %v458, 1.0
  %v460 = vrcp.pop %v459
  %v461 = vmul.f32 1.0, %v460
  %v462 = vtanh.pop %v455
  %v464 = vrot.slane %v360, 6
  %v466 = vmul.f32 %v461, %v464
  %468 = vrot.lane.b32.xlu0 %v462, 64
  %v469 = vpop.permute.xlu0 %468
  %v471 = vmul.f32 %v461, %v469
  %473 = vrot.lane.b32.xlu0 %v471, 32
  %v474 = vpop.permute.xlu0 %473
  %v476 = vadd.f32 %v466, %v474
  %v477 = vtanh.pop %v476
  %479 = vrot.lane.b32.xlu0 %v477, 64
  %v480 = vpop.permute.xlu0 %479
  %v482 = vmul.f32 %v461, %v480
  %484 = vrot.lane.b32.xlu0 %v482, 32
  %v485 = vpop.permute.xlu0 %484
  %vm487 = vcmask 128004
  %488 = vst.msk [vmem:[#allocation2] sm:$0x30] %vm487, %v485
  %489 = vrot.lane.b32.xlu0 %v482, 16
  %v490 = vpop.permute.xlu0 %489
  %492 = vst.msk [vmem:[#allocation3 + $0x6] sm:$0x30] %vm487, %v490
  %v493 = vrot.slane %v482, 4
  %494 = vrot.lane.b32.xlu0 %v493, 32
  %v495 = vpop.permute.xlu0 %494
  %v496 = vsel %vm42, %v495, 0
  %498 = vmatprep.subr.mxu0 0.0
  %499 = vmatpush1.msra.mxu0 0.0
  %500 = vmatprep.subr.mxu0 0.0
  %501 = vmatpush1.msra.mxu0 0.0
  %502 = vmatprep.subr.mxu0 0.0
  %503 = vmatpush1.msra.mxu0 0.0
  %504 = vmatprep.subr.mxu0 0.0
  %505 = vmatpush1.msra.mxu0 0.0
  %506 = vmatprep.subr.mxu0 0.0
  %507 = vmatpush1.msra.mxu0 0.0
  %508 = vmatprep.subr.mxu0 0.0
  %509 = vmatpush1.msra.mxu0 0.0
  %510 = vmatprep.subr.mxu0 0.0
  %511 = vmatpush1.msra.mxu0 0.0
  %512 = vmatprep.subr.mxu0 0.0
  %513 = vmatpush1.msra.mxu0 0.0
  %514 = vmatprep.subr.mxu0 0.0
  %515 = vmatpush1.msra.mxu0 0.0
  %516 = vmatprep.subr.mxu0 0.0
  %517 = vmatpush1.msra.mxu0 0.0
  %518 = vmatprep.subr.mxu0 0.0
  %519 = vmatpush1.msra.mxu0 0.0
  %520 = vmatprep.subr.mxu0 0.0
  %521 = vmatpush1.msra.mxu0 0.0
  %522 = vmatprep.subr.mxu0 0.0
  %523 = vmatpush1.msra.mxu0 %v142
  %524 = vmatprep.subr.mxu0 0.0
  %525 = vmatpush1.msra.mxu0 %v141
  %526 = vmatprep.subr.mxu0 0.0
  %527 = vmatpush1.msra.mxu0 %v140
  %528 = vmatprep.subr.mxu0 0.0
  %529 = vmatpush1.msra.mxu0 %v139
  %530 = vmatprep.subr.mxu0 0.0
  %531 = vmatpush2.msra.mxu0 0.0
  %532 = vmatprep.subr.mxu0 0.0
  %533 = vmatpush2.msra.mxu0 0.0
  %534 = vmatprep.subr.mxu0 0.0
  %535 = vmatpush2.msra.mxu0 0.0
  %536 = vmatprep.subr.mxu0 0.0
  %537 = vmatpush2.msra.mxu0 0.0
  %538 = vmatprep.subr.mxu0 0.0
  %539 = vmatpush2.msra.mxu0 0.0
  %540 = vmatprep.subr.mxu0 0.0
  %541 = vmatpush2.msra.mxu0 0.0
  %542 = vmatprep.subr.mxu0 0.0
  %543 = vmatpush2.msra.mxu0 0.0
  %544 = vmatprep.subr.mxu0 0.0
  %545 = vmatpush2.msra.mxu0 0.0
  %546 = vmatprep.subr.mxu0 0.0
  %547 = vmatpush2.msra.mxu0 0.0
  %548 = vmatprep.subr.mxu0 0.0
  %549 = vmatpush2.msra.mxu0 0.0
  %550 = vmatprep.subr.mxu0 0.0
  %551 = vmatpush2.msra.mxu0 0.0
  %552 = vmatprep.subr.mxu0 0.0
  %553 = vmatpush2.msra.mxu0 0.0
  %554 = vmatprep.subr.mxu0 0.0
  %555 = vmatpush2.msra.mxu0 0.0
  %556 = vmatprep.subr.mxu0 0.0
  %557 = vmatpush2.msra.mxu0 0.0
  %558 = vmatprep.subr.mxu0 0.0
  %559 = vmatpush2.msra.mxu0 0.0
  %560 = vmatprep.subr.mxu0 0.0
  %561 = vmatpush2.msra.mxu0 0.0
  %562 = vmatprep.mubr.f32.mxu0 0.0
  %563 = vmatmul.mubr.f32.gmra.mxu0 %v496
  %v564 = vpop.f32.mrf.mxu0
  %v565 = vadd.f32 0.0, %v564
  %v566 = vpop.f32.mrf.mxu0
  %567 = vdwg.mxu0
  %v569 = vrot.slane %v565, 2
  %v571 = vadd.f32 %v263, %v569
  %v572 = vxor.u32 %v571, 2147483648
  %v573 = vmul.f32 %v572, 1.442695
  %v574 = vpow.pop %v573
  %v575 = vadd.f32 %v574, 1.0
  %v576 = vrcp.pop %v575
  %v577 = vmul.f32 1.0, %v576
  %v578 = vtanh.pop %v571
  %v580 = vrot.slane %v476, 6
  %v582 = vmul.f32 %v577, %v580
  %584 = vrot.lane.b32.xlu0 %v578, 64
  %v585 = vpop.permute.xlu0 %584
  %v587 = vmul.f32 %v577, %v585
  %589 = vrot.lane.b32.xlu0 %v587, 32
  %v590 = vpop.permute.xlu0 %589
  %v592 = vadd.f32 %v582, %v590
  %v593 = vtanh.pop %v592
  %595 = vrot.lane.b32.xlu0 %v593, 64
  %v596 = vpop.permute.xlu0 %595
  %v598 = vmul.f32 %v577, %v596
  %600 = vrot.lane.b32.xlu0 %v598, 32
  %v601 = vpop.permute.xlu0 %600
  %vm603 = vcmask 130054
  %604 = vst.msk [vmem:[#allocation2] sm:$0xc0] %vm603, %v601
  %605 = vrot.lane.b32.xlu0 %v598, 16
  %v606 = vpop.permute.xlu0 %605
  %608 = vst.msk [vmem:[#allocation3 + $0x2] sm:$0xc0] %vm603, %v606
  %v610 = vrot.slane %v116, 6
  %v612 = vsel %vm138, %v121, %v610
  %v613 = vrot.slane %v598, 6
  %614 = vrot.lane.b32.xlu0 %v613, 32
  %v615 = vpop.permute.xlu0 %614
  %v616 = vsel %vm42, %v615, 0
  %618 = vmatprep.subr.mxu0 0.0
  %619 = vmatpush1.msra.mxu0 0.0
  %620 = vmatprep.subr.mxu0 0.0
  %621 = vmatpush1.msra.mxu0 0.0
  %622 = vmatprep.subr.mxu0 0.0
  %623 = vmatpush1.msra.mxu0 0.0
  %624 = vmatprep.subr.mxu0 0.0
  %625 = vmatpush1.msra.mxu0 0.0
  %626 = vmatprep.subr.mxu0 0.0
  %627 = vmatpush1.msra.mxu0 0.0
  %628 = vmatprep.subr.mxu0 0.0
  %629 = vmatpush1.msra.mxu0 0.0
  %630 = vmatprep.subr.mxu0 0.0
  %631 = vmatpush1.msra.mxu0 0.0
  %632 = vmatprep.subr.mxu0 0.0
  %633 = vmatpush1.msra.mxu0 0.0
  %634 = vmatprep.subr.mxu0 0.0
  %635 = vmatpush1.msra.mxu0 0.0
  %636 = vmatprep.subr.mxu0 0.0
  %637 = vmatpush1.msra.mxu0 0.0
  %638 = vmatprep.subr.mxu0 0.0
  %639 = vmatpush1.msra.mxu0 0.0
  %640 = vmatprep.subr.mxu0 0.0
  %641 = vmatpush1.msra.mxu0 0.0
  %642 = vmatprep.subr.mxu0 0.0
  %643 = vmatpush1.msra.mxu0 %v142
  %644 = vmatprep.subr.mxu0 0.0
  %645 = vmatpush1.msra.mxu0 %v141
  %646 = vmatprep.subr.mxu0 0.0
  %647 = vmatpush1.msra.mxu0 %v140
  %648 = vmatprep.subr.mxu0 0.0
  %649 = vmatpush1.msra.mxu0 %v139
  %650 = vmatprep.subr.mxu0 0.0
  %651 = vmatpush2.msra.mxu0 0.0
  %652 = vmatprep.subr.mxu0 0.0
  %653 = vmatpush2.msra.mxu0 0.0
  %654 = vmatprep.subr.mxu0 0.0
  %655 = vmatpush2.msra.mxu0 0.0
  %656 = vmatprep.subr.mxu0 0.0
  %657 = vmatpush2.msra.mxu0 0.0
  %658 = vmatprep.subr.mxu0 0.0
  %659 = vmatpush2.msra.mxu0 0.0
  %660 = vmatprep.subr.mxu0 0.0
  %661 = vmatpush2.msra.mxu0 0.0
  %662 = vmatprep.subr.mxu0 0.0
  %663 = vmatpush2.msra.mxu0 0.0
  %664 = vmatprep.subr.mxu0 0.0
  %665 = vmatpush2.msra.mxu0 0.0
  %666 = vmatprep.subr.mxu0 0.0
  %667 = vmatpush2.msra.mxu0 0.0
  %668 = vmatprep.subr.mxu0 0.0
  %669 = vmatpush2.msra.mxu0 0.0
  %670 = vmatprep.subr.mxu0 0.0
  %671 = vmatpush2.msra.mxu0 0.0
  %672 = vmatprep.subr.mxu0 0.0
  %673 = vmatpush2.msra.mxu0 0.0
  %674 = vmatprep.subr.mxu0 0.0
  %675 = vmatpush2.msra.mxu0 0.0
  %676 = vmatprep.subr.mxu0 0.0
  %677 = vmatpush2.msra.mxu0 0.0
  %678 = vmatprep.subr.mxu0 0.0
  %679 = vmatpush2.msra.mxu0 0.0
  %680 = vmatprep.subr.mxu0 0.0
  %681 = vmatpush2.msra.mxu0 0.0
  %682 = vmatprep.mubr.f32.mxu0 0.0
  %683 = vmatmul.mubr.f32.gmra.mxu0 %v616
  %v684 = vpop.f32.mrf.mxu0
  %v685 = vadd.f32 0.0, %v684
  %v686 = vpop.f32.mrf.mxu0
  %687 = vdwg.mxu0
  %v688 = vadd.f32 %v612, %v685
  %v689 = vxor.u32 %v688, 2147483648
  %v690 = vmul.f32 %v689, 1.442695
  %v691 = vpow.pop %v690
  %v692 = vadd.f32 %v691, 1.0
  %v693 = vrcp.pop %v692
  %v694 = vmul.f32 1.0, %v693
  %v695 = vtanh.pop %v688
  %v697 = vrot.slane %v592, 6
  %v699 = vmul.f32 %v694, %v697
  %701 = vrot.lane.b32.xlu0 %v695, 64
  %v702 = vpop.permute.xlu0 %701
  %v704 = vmul.f32 %v694, %v702
  %706 = vrot.lane.b32.xlu0 %v704, 32
  %v707 = vpop.permute.xlu0 %706
  %v709 = vadd.f32 %v699, %v707
  %v710 = vtanh.pop %v709
  %712 = vrot.lane.b32.xlu0 %v710, 64
  %v713 = vpop.permute.xlu0 %712
  %v715 = vmul.f32 %v694, %v713
  %717 = vrot.lane.b32.xlu0 %v715, 32
  %v718 = vpop.permute.xlu0 %717
  %720 = vst.msk [vmem:[#allocation2 + $0x8] sm:$0x3] %vm255, %v718
  %721 = vrot.lane.b32.xlu0 %v715, 16
  %v722 = vpop.permute.xlu0 %721
  %724 = vst.msk [vmem:[#allocation3 + $0x6] sm:$0x3] %vm255, %v722
  %v725 = vrot.slane %v116, 2
  %v727 = vsel %vm138, %v121, %v725
  %v728 = vsel %vm42, %v718, 0
  %730 = vmatprep.subr.mxu0 0.0
  %731 = vmatpush1.msra.mxu0 0.0
  %732 = vmatprep.subr.mxu0 0.0
  %733 = vmatpush1.msra.mxu0 0.0
  %734 = vmatprep.subr.mxu0 0.0
  %735 = vmatpush1.msra.mxu0 0.0
  %736 = vmatprep.subr.mxu0 0.0
  %737 = vmatpush1.msra.mxu0 0.0
  %738 = vmatprep.subr.mxu0 0.0
  %739 = vmatpush1.msra.mxu0 0.0
  %740 = vmatprep.subr.mxu0 0.0
  %741 = vmatpush1.msra.mxu0 0.0
  %742 = vmatprep.subr.mxu0 0.0
  %743 = vmatpush1.msra.mxu0 0.0
  %744 = vmatprep.subr.mxu0 0.0
  %745 = vmatpush1.msra.mxu0 0.0
  %746 = vmatprep.subr.mxu0 0.0
  %747 = vmatpush1.msra.mxu0 0.0
  %748 = vmatprep.subr.mxu0 0.0
  %749 = vmatpush1.msra.mxu0 0.0
  %750 = vmatprep.subr.mxu0 0.0
  %751 = vmatpush1.msra.mxu0 0.0
  %752 = vmatprep.subr.mxu0 0.0
  %753 = vmatpush1.msra.mxu0 0.0
  %754 = vmatprep.subr.mxu0 0.0
  %755 = vmatpush1.msra.mxu0 %v142
  %756 = vmatprep.subr.mxu0 0.0
  %757 = vmatpush1.msra.mxu0 %v141
  %758 = vmatprep.subr.mxu0 0.0
  %759 = vmatpush1.msra.mxu0 %v140
  %760 = vmatprep.subr.mxu0 0.0
  %761 = vmatpush1.msra.mxu0 %v139
  %762 = vmatprep.subr.mxu0 0.0
  %763 = vmatpush2.msra.mxu0 0.0
  %764 = vmatprep.subr.mxu0 0.0
  %765 = vmatpush2.msra.mxu0 0.0
  %766 = vmatprep.subr.mxu0 0.0
  %767 = vmatpush2.msra.mxu0 0.0
  %768 = vmatprep.subr.mxu0 0.0
  %769 = vmatpush2.msra.mxu0 0.0
  %770 = vmatprep.subr.mxu0 0.0
  %771 = vmatpush2.msra.mxu0 0.0
  %772 = vmatprep.subr.mxu0 0.0
  %773 = vmatpush2.msra.mxu0 0.0
  %774 = vmatprep.subr.mxu0 0.0
  %775 = vmatpush2.msra.mxu0 0.0
  %776 = vmatprep.subr.mxu0 0.0
  %777 = vmatpush2.msra.mxu0 0.0
  %778 = vmatprep.subr.mxu0 0.0
  %779 = vmatpush2.msra.mxu0 0.0
  %780 = vmatprep.subr.mxu0 0.0
  %781 = vmatpush2.msra.mxu0 0.0
  %782 = vmatprep.subr.mxu0 0.0
  %783 = vmatpush2.msra.mxu0 0.0
  %784 = vmatprep.subr.mxu0 0.0
  %785 = vmatpush2.msra.mxu0 0.0
  %786 = vmatprep.subr.mxu0 0.0
  %787 = vmatpush2.msra.mxu0 0.0
  %788 = vmatprep.subr.mxu0 0.0
  %789 = vmatpush2.msra.mxu0 0.0
  %790 = vmatprep.subr.mxu0 0.0
  %791 = vmatpush2.msra.mxu0 0.0
  %792 = vmatprep.subr.mxu0 0.0
  %793 = vmatpush2.msra.mxu0 0.0
  %794 = vmatprep.mubr.f32.mxu0 0.0
  %795 = vmatmul.mubr.f32.gmra.mxu0 %v728
  %v796 = vpop.f32.mrf.mxu0
  %v797 = vadd.f32 0.0, %v796
  %v798 = vpop.f32.mrf.mxu0
  %799 = vdwg.mxu0
  %v801 = vrot.slane %v797, 6
  %v803 = vadd.f32 %v727, %v801
  %v804 = vxor.u32 %v803, 2147483648
  %v805 = vmul.f32 %v804, 1.442695
  %v806 = vpow.pop %v805
  %v807 = vadd.f32 %v806, 1.0
  %v808 = vrcp.pop %v807
  %v809 = vmul.f32 1.0, %v808
  %v810 = vtanh.pop %v803
  %v812 = vrot.slane %v709, 6
  %v814 = vmul.f32 %v809, %v812
  %816 = vrot.lane.b32.xlu0 %v810, 64
  %v817 = vpop.permute.xlu0 %816
  %v819 = vmul.f32 %v809, %v817
  %821 = vrot.lane.b32.xlu0 %v819, 32
  %v822 = vpop.permute.xlu0 %821
  %v824 = vadd.f32 %v814, %v822
  %v825 = vtanh.pop %v824
  %827 = vrot.lane.b32.xlu0 %v825, 64
  %v828 = vpop.permute.xlu0 %827
  %v830 = vmul.f32 %v809, %v828
  %832 = vrot.lane.b32.xlu0 %v830, 32
  %v833 = vpop.permute.xlu0 %832
  %835 = vst.msk [vmem:[#allocation2 + $0x8] sm:$0xc] %vm371, %v833
  %836 = vrot.lane.b32.xlu0 %v830, 16
  %v837 = vpop.permute.xlu0 %836
  %839 = vst.msk [vmem:[#allocation3 + $0x2] sm:$0xc] %vm371, %v837
  %v840 = vrot.slane %v830, 2
  %841 = vrot.lane.b32.xlu0 %v840, 32
  %v842 = vpop.permute.xlu0 %841
  %v843 = vsel %vm42, %v842, 0
  %845 = vmatprep.subr.mxu0 0.0
  %846 = vmatpush1.msra.mxu0 0.0
  %847 = vmatprep.subr.mxu0 0.0
  %848 = vmatpush1.msra.mxu0 0.0
  %849 = vmatprep.subr.mxu0 0.0
  %850 = vmatpush1.msra.mxu0 0.0
  %851 = vmatprep.subr.mxu0 0.0
  %852 = vmatpush1.msra.mxu0 0.0
  %853 = vmatprep.subr.mxu0 0.0
  %854 = vmatpush1.msra.mxu0 0.0
  %855 = vmatprep.subr.mxu0 0.0
  %856 = vmatpush1.msra.mxu0 0.0
  %857 = vmatprep.subr.mxu0 0.0
  %858 = vmatpush1.msra.mxu0 0.0
  %859 = vmatprep.subr.mxu0 0.0
  %860 = vmatpush1.msra.mxu0 0.0
  %861 = vmatprep.subr.mxu0 0.0
  %862 = vmatpush1.msra.mxu0 0.0
  %863 = vmatprep.subr.mxu0 0.0
  %864 = vmatpush1.msra.mxu0 0.0
  %865 = vmatprep.subr.mxu0 0.0
  %866 = vmatpush1.msra.mxu0 0.0
  %867 = vmatprep.subr.mxu0 0.0
  %868 = vmatpush1.msra.mxu0 0.0
  %869 = vmatprep.subr.mxu0 0.0
  %870 = vmatpush1.msra.mxu0 %v142
  %871 = vmatprep.subr.mxu0 0.0
  %872 = vmatpush1.msra.mxu0 %v141
  %873 = vmatprep.subr.mxu0 0.0
  %874 = vmatpush1.msra.mxu0 %v140
  %875 = vmatprep.subr.mxu0 0.0
  %876 = vmatpush1.msra.mxu0 %v139
  %877 = vmatprep.subr.mxu0 0.0
  %878 = vmatpush2.msra.mxu0 0.0
  %879 = vmatprep.subr.mxu0 0.0
  %880 = vmatpush2.msra.mxu0 0.0
  %881 = vmatprep.subr.mxu0 0.0
  %882 = vmatpush2.msra.mxu0 0.0
  %883 = vmatprep.subr.mxu0 0.0
  %884 = vmatpush2.msra.mxu0 0.0
  %885 = vmatprep.subr.mxu0 0.0
  %886 = vmatpush2.msra.mxu0 0.0
  %887 = vmatprep.subr.mxu0 0.0
  %888 = vmatpush2.msra.mxu0 0.0
  %889 = vmatprep.subr.mxu0 0.0
  %890 = vmatpush2.msra.mxu0 0.0
  %891 = vmatprep.subr.mxu0 0.0
  %892 = vmatpush2.msra.mxu0 0.0
  %893 = vmatprep.subr.mxu0 0.0
  %894 = vmatpush2.msra.mxu0 0.0
  %895 = vmatprep.subr.mxu0 0.0
  %896 = vmatpush2.msra.mxu0 0.0
  %897 = vmatprep.subr.mxu0 0.0
  %898 = vmatpush2.msra.mxu0 0.0
  %899 = vmatprep.subr.mxu0 0.0
  %900 = vmatpush2.msra.mxu0 0.0
  %901 = vmatprep.subr.mxu0 0.0
  %902 = vmatpush2.msra.mxu0 0.0
  %903 = vmatprep.subr.mxu0 0.0
  %904 = vmatpush2.msra.mxu0 0.0
  %905 = vmatprep.subr.mxu0 0.0
  %906 = vmatpush2.msra.mxu0 0.0
  %907 = vmatprep.subr.mxu0 0.0
  %908 = vmatpush2.msra.mxu0 0.0
  %909 = vmatprep.mubr.f32.mxu0 0.0
  %910 = vmatmul.mubr.f32.gmra.mxu0 %v843
  %v911 = vpop.f32.mrf.mxu0
  %v912 = vadd.f32 0.0, %v911
  %v913 = vpop.f32.mrf.mxu0
  %914 = vdwg.mxu0
  %v916 = vrot.slane %v912, 4
  %v918 = vadd.f32 %v612, %v916
  %v919 = vxor.u32 %v918, 2147483648
  %v920 = vmul.f32 %v919, 1.442695
  %v921 = vpow.pop %v920
  %v922 = vadd.f32 %v921, 1.0
  %v923 = vrcp.pop %v922
  %v924 = vmul.f32 1.0, %v923
  %v925 = vtanh.pop %v918
  %v927 = vrot.slane %v824, 6
  %v929 = vmul.f32 %v924, %v927
  %931 = vrot.lane.b32.xlu0 %v925, 64
  %v932 = vpop.permute.xlu0 %931
  %v934 = vmul.f32 %v924, %v932
  %936 = vrot.lane.b32.xlu0 %v934, 32
  %v937 = vpop.permute.xlu0 %936
  %v939 = vadd.f32 %v929, %v937
  %v940 = vtanh.pop %v939
  %942 = vrot.lane.b32.xlu0 %v940, 64
  %v943 = vpop.permute.xlu0 %942
  %v945 = vmul.f32 %v924, %v943
  %947 = vrot.lane.b32.xlu0 %v945, 32
  %v948 = vpop.permute.xlu0 %947
  %950 = vst.msk [vmem:[#allocation2 + $0x8] sm:$0x30] %vm487, %v948
  %951 = vrot.lane.b32.xlu0 %v945, 16
  %v952 = vpop.permute.xlu0 %951
  %954 = vst.msk [vmem:[#allocation3 - $0x2] sm:$0x30] %vm487, %v952
  %v955 = vrot.slane %v945, 4
  %956 = vrot.lane.b32.xlu0 %v955, 32
  %v957 = vpop.permute.xlu0 %956
  %v958 = vsel %vm42, %v957, 0
  %960 = vmatprep.subr.mxu0 0.0
  %961 = vmatpush1.msra.mxu0 0.0
  %962 = vmatprep.subr.mxu0 0.0
  %963 = vmatpush1.msra.mxu0 0.0
  %964 = vmatprep.subr.mxu0 0.0
  %965 = vmatpush1.msra.mxu0 0.0
  %966 = vmatprep.subr.mxu0 0.0
  %967 = vmatpush1.msra.mxu0 0.0
  %968 = vmatprep.subr.mxu0 0.0
  %969 = vmatpush1.msra.mxu0 0.0
  %970 = vmatprep.subr.mxu0 0.0
  %971 = vmatpush1.msra.mxu0 0.0
  %972 = vmatprep.subr.mxu0 0.0
  %973 = vmatpush1.msra.mxu0 0.0
  %974 = vmatprep.subr.mxu0 0.0
  %975 = vmatpush1.msra.mxu0 0.0
  %976 = vmatprep.subr.mxu0 0.0
  %977 = vmatpush1.msra.mxu0 0.0
  %978 = vmatprep.subr.mxu0 0.0
  %979 = vmatpush1.msra.mxu0 0.0
  %980 = vmatprep.subr.mxu0 0.0
  %981 = vmatpush1.msra.mxu0 0.0
  %982 = vmatprep.subr.mxu0 0.0
  %983 = vmatpush1.msra.mxu0 0.0
  %984 = vmatprep.subr.mxu0 0.0
  %985 = vmatpush1.msra.mxu0 %v142
  %986 = vmatprep.subr.mxu0 0.0
  %987 = vmatpush1.msra.mxu0 %v141
  %988 = vmatprep.subr.mxu0 0.0
  %989 = vmatpush1.msra.mxu0 %v140
  %990 = vmatprep.subr.mxu0 0.0
  %991 = vmatpush1.msra.mxu0 %v139
  %992 = vmatprep.subr.mxu0 0.0
  %993 = vmatpush2.msra.mxu0 0.0
  %994 = vmatprep.subr.mxu0 0.0
  %995 = vmatpush2.msra.mxu0 0.0
  %996 = vmatprep.subr.mxu0 0.0
  %997 = vmatpush2.msra.mxu0 0.0
  %998 = vmatprep.subr.mxu0 0.0
  %999 = vmatpush2.msra.mxu0 0.0
  %1000 = vmatprep.subr.mxu0 0.0
  %1001 = vmatpush2.msra.mxu0 0.0
  %1002 = vmatprep.subr.mxu0 0.0
  %1003 = vmatpush2.msra.mxu0 0.0
  %1004 = vmatprep.subr.mxu0 0.0
  %1005 = vmatpush2.msra.mxu0 0.0
  %1006 = vmatprep.subr.mxu0 0.0
  %1007 = vmatpush2.msra.mxu0 0.0
  %1008 = vmatprep.subr.mxu0 0.0
  %1009 = vmatpush2.msra.mxu0 0.0
  %1010 = vmatprep.subr.mxu0 0.0
  %1011 = vmatpush2.msra.mxu0 0.0
  %1012 = vmatprep.subr.mxu0 0.0
  %1013 = vmatpush2.msra.mxu0 0.0
  %1014 = vmatprep.subr.mxu0 0.0
  %1015 = vmatpush2.msra.mxu0 0.0
  %1016 = vmatprep.subr.mxu0 0.0
  %1017 = vmatpush2.msra.mxu0 0.0
  %1018 = vmatprep.subr.mxu0 0.0
  %1019 = vmatpush2.msra.mxu0 0.0
  %1020 = vmatprep.subr.mxu0 0.0
  %1021 = vmatpush2.msra.mxu0 0.0
  %1022 = vmatprep.subr.mxu0 0.0
  %1023 = vmatpush2.msra.mxu0 0.0
  %1024 = vmatprep.mubr.f32.mxu0 0.0
  %1025 = vmatmul.mubr.f32.gmra.mxu0 %v958
  %v1026 = vpop.f32.mrf.mxu0
  %v1027 = vadd.f32 0.0, %v1026
  %v1028 = vpop.f32.mrf.mxu0
  %1029 = vdwg.mxu0
  %v1031 = vrot.slane %v1027, 2
  %v1033 = vadd.f32 %v727, %v1031
  %v1034 = vxor.u32 %v1033, 2147483648
  %v1035 = vmul.f32 %v1034, 1.442695
  %v1036 = vpow.pop %v1035
  %v1037 = vadd.f32 %v1036, 1.0
  %v1038 = vrcp.pop %v1037
  %v1039 = vmul.f32 1.0, %v1038
  %v1040 = vtanh.pop %v1033
  %v1042 = vrot.slane %v939, 6
  %v1044 = vmul.f32 %v1039, %v1042
  %1046 = vrot.lane.b32.xlu0 %v1040, 64
  %v1047 = vpop.permute.xlu0 %1046
  %v1049 = vmul.f32 %v1039, %v1047
  %1051 = vrot.lane.b32.xlu0 %v1049, 32
  %v1052 = vpop.permute.xlu0 %1051
  %v1054 = vadd.f32 %v1044, %v1052
  %v1055 = vtanh.pop %v1054
  %1057 = vrot.lane.b32.xlu0 %v1055, 64
  %v1058 = vpop.permute.xlu0 %1057
  %v1060 = vmul.f32 %v1039, %v1058
  %1062 = vrot.lane.b32.xlu0 %v1060, 32
  %v1063 = vpop.permute.xlu0 %1062
  %1065 = vst.msk [vmem:[#allocation2 + $0x8] sm:$0xc0] %vm603, %v1063
  %1066 = vrot.lane.b32.xlu0 %v1060, 16
  %v1067 = vpop.permute.xlu0 %1066
  %1069 = vst.msk [vmem:[#allocation3 - $0x6] sm:$0xc0] %vm603, %v1067
  %v1070 = vld [vmem:[%s6] sm:$0xff]
  %v1071 = vld [vmem:[%s6 + $0x8] sm:$0xff]
  %v1072 = vld [vmem:[%s6 + $0x10] sm:$0xff]
  %v1073 = vld [vmem:[%s6 + $0x18] sm:$0xff]
  %v1074 = vld [vmem:[#allocation2] sm:$0xff]
  %v1075 = vld [vmem:[#allocation2 + $0x8] sm:$0xff]
  %v1076 = vld [vmem:[#allocation3] sm:$0xff]
  %v1077 = vld [vmem:[#allocation3 + $0x8] sm:$0xff]
  %vm1078 = vcmask 130048
  %v1080 = vsel %vm1078, %v1076, 0
  %v1083 = vsel %vm1078, %v1077, 0
  %1085 = vmatprep.subr.mxu0 0.0
  %1086 = vmatpush1.msra.mxu0 0.0
  %1087 = vmatprep.subr.mxu0 0.0
  %1088 = vmatpush1.msra.mxu0 0.0
  %1089 = vmatprep.subr.mxu0 0.0
  %1090 = vmatpush1.msra.mxu0 0.0
  %1091 = vmatprep.subr.mxu0 0.0
  %1092 = vmatpush1.msra.mxu0 0.0
  %1093 = vmatprep.subr.mxu0 0.0
  %1094 = vmatpush1.msra.mxu0 0.0
  %1095 = vmatprep.subr.mxu0 0.0
  %1096 = vmatpush1.msra.mxu0 0.0
  %1097 = vmatprep.subr.mxu0 0.0
  %1098 = vmatpush1.msra.mxu0 0.0
  %1099 = vmatprep.subr.mxu0 0.0
  %1100 = vmatpush1.msra.mxu0 0.0
  %1101 = vmatprep.subr.mxu0 0.0
  %1102 = vmatpush1.msra.mxu0 0.0
  %1103 = vmatprep.subr.mxu0 0.0
  %1104 = vmatpush1.msra.mxu0 0.0
  %1105 = vmatprep.subr.mxu0 0.0
  %1106 = vmatpush1.msra.mxu0 0.0
  %1107 = vmatprep.subr.mxu0 0.0
  %1108 = vmatpush1.msra.mxu0 0.0
  %1109 = vmatprep.subr.mxu0 0.0
  %1110 = vmatpush1.msra.mxu0 0.0
  %1111 = vmatprep.subr.mxu0 0.0
  %1112 = vmatpush1.msra.mxu0 0.0
  %1113 = vmatprep.subr.mxu0 0.0
  %1114 = vmatpush1.msra.mxu0 %v1073
  %1115 = vmatprep.subr.mxu0 0.0
  %1116 = vmatpush1.msra.mxu0 %v1072
  %1117 = vmatprep.subr.mxu0 0.0
  %1118 = vmatpush2.msra.mxu0 0.0
  %1119 = vmatprep.subr.mxu0 0.0
  %1120 = vmatpush2.msra.mxu0 0.0
  %1121 = vmatprep.subr.mxu0 0.0
  %1122 = vmatpush2.msra.mxu0 0.0
  %1123 = vmatprep.subr.mxu0 0.0
  %1124 = vmatpush2.msra.mxu0 0.0
  %1125 = vmatprep.subr.mxu0 0.0
  %1126 = vmatpush2.msra.mxu0 0.0
  %1127 = vmatprep.subr.mxu0 0.0
  %1128 = vmatpush2.msra.mxu0 0.0
  %1129 = vmatprep.subr.mxu0 0.0
  %1130 = vmatpush2.msra.mxu0 0.0
  %1131 = vmatprep.subr.mxu0 0.0
  %1132 = vmatpush2.msra.mxu0 0.0
  %1133 = vmatprep.subr.mxu0 0.0
  %1134 = vmatpush2.msra.mxu0 0.0
  %1135 = vmatprep.subr.mxu0 0.0
  %1136 = vmatpush2.msra.mxu0 0.0
  %1137 = vmatprep.subr.mxu0 0.0
  %1138 = vmatpush2.msra.mxu0 0.0
  %1139 = vmatprep.subr.mxu0 0.0
  %1140 = vmatpush2.msra.mxu0 0.0
  %1141 = vmatprep.subr.mxu0 0.0
  %1142 = vmatpush2.msra.mxu0 0.0
  %1143 = vmatprep.subr.mxu0 0.0
  %1144 = vmatpush2.msra.mxu0 0.0
  %1145 = vmatprep.subr.mxu0 0.0
  %1146 = vmatpush2.msra.mxu0 0.0
  %1147 = vmatprep.subr.mxu0 0.0
  %1148 = vmatpush2.msra.mxu0 0.0
  %1149 = vmatprep.mubr.f32.mxu0 0.0
  %1150 = vmatmul.mubr.f32.gmra.mxu0 %v1080
  %v1151 = vpop.f32.mrf.mxu0
  %v1152 = vadd.f32 0.0, %v1151
  %v1153 = vpop.f32.mrf.mxu0
  %1154 = vmatprep.mubr.f32.mxu0 0.0
  %1155 = vmatmul.mubr.f32.gmra.mxu0 %v1083
  %v1156 = vpop.f32.mrf.mxu0
  %v1157 = vadd.f32 0.0, %v1156
  %v1158 = vpop.f32.mrf.mxu0
  %1159 = vdwg.mxu0
  %v1161 = vsel %vm1078, %v1074, 0
  %v1164 = vsel %vm1078, %v1075, 0
  %1166 = vmatprep.subr.mxu0 0.0
  %1167 = vmatpush1.msra.mxu0 0.0
  %1168 = vmatprep.subr.mxu0 0.0
  %1169 = vmatpush1.msra.mxu0 0.0
  %1170 = vmatprep.subr.mxu0 0.0
  %1171 = vmatpush1.msra.mxu0 0.0
  %1172 = vmatprep.subr.mxu0 0.0
  %1173 = vmatpush1.msra.mxu0 0.0
  %1174 = vmatprep.subr.mxu0 0.0
  %1175 = vmatpush1.msra.mxu0 0.0
  %1176 = vmatprep.subr.mxu0 0.0
  %1177 = vmatpush1.msra.mxu0 0.0
  %1178 = vmatprep.subr.mxu0 0.0
  %1179 = vmatpush1.msra.mxu0 0.0
  %1180 = vmatprep.subr.mxu0 0.0
  %1181 = vmatpush1.msra.mxu0 0.0
  %1182 = vmatprep.subr.mxu0 0.0
  %1183 = vmatpush1.msra.mxu0 0.0
  %1184 = vmatprep.subr.mxu0 0.0
  %1185 = vmatpush1.msra.mxu0 0.0
  %1186 = vmatprep.subr.mxu0 0.0
  %1187 = vmatpush1.msra.mxu0 0.0
  %1188 = vmatprep.subr.mxu0 0.0
  %1189 = vmatpush1.msra.mxu0 0.0
  %1190 = vmatprep.subr.mxu0 0.0
  %1191 = vmatpush1.msra.mxu0 0.0
  %1192 = vmatprep.subr.mxu0 0.0
  %1193 = vmatpush1.msra.mxu0 0.0
  %1194 = vmatprep.subr.mxu0 0.0
  %1195 = vmatpush1.msra.mxu0 %v1071
  %1196 = vmatprep.subr.mxu0 0.0
  %1197 = vmatpush1.msra.mxu0 %v1070
  %1198 = vmatprep.subr.mxu0 0.0
  %1199 = vmatpush2.msra.mxu0 0.0
  %1200 = vmatprep.subr.mxu0 0.0
  %1201 = vmatpush2.msra.mxu0 0.0
  %1202 = vmatprep.subr.mxu0 0.0
  %1203 = vmatpush2.msra.mxu0 0.0
  %1204 = vmatprep.subr.mxu0 0.0
  %1205 = vmatpush2.msra.mxu0 0.0
  %1206 = vmatprep.subr.mxu0 0.0
  %1207 = vmatpush2.msra.mxu0 0.0
  %1208 = vmatprep.subr.mxu0 0.0
  %1209 = vmatpush2.msra.mxu0 0.0
  %1210 = vmatprep.subr.mxu0 0.0
  %1211 = vmatpush2.msra.mxu0 0.0
  %1212 = vmatprep.subr.mxu0 0.0
  %1213 = vmatpush2.msra.mxu0 0.0
  %1214 = vmatprep.subr.mxu0 0.0
  %1215 = vmatpush2.msra.mxu0 0.0
  %1216 = vmatprep.subr.mxu0 0.0
  %1217 = vmatpush2.msra.mxu0 0.0
  %1218 = vmatprep.subr.mxu0 0.0
  %1219 = vmatpush2.msra.mxu0 0.0
  %1220 = vmatprep.subr.mxu0 0.0
  %1221 = vmatpush2.msra.mxu0 0.0
  %1222 = vmatprep.subr.mxu0 0.0
  %1223 = vmatpush2.msra.mxu0 0.0
  %1224 = vmatprep.subr.mxu0 0.0
  %1225 = vmatpush2.msra.mxu0 0.0
  %1226 = vmatprep.subr.mxu0 0.0
  %1227 = vmatpush2.msra.mxu0 0.0
  %1228 = vmatprep.subr.mxu0 0.0
  %1229 = vmatpush2.msra.mxu0 0.0
  %1230 = vmatprep.mubr.f32.mxu0 0.0
  %1231 = vmatmul.mubr.f32.gmra.mxu0 %v1161
  %v1232 = vpop.f32.mrf.mxu0
  %v1233 = vadd.f32 %v1152, %v1232
  %v1234 = vpop.f32.mrf.mxu0
  %1235 = vmatprep.mubr.f32.mxu0 0.0
  %1236 = vmatmul.mubr.f32.gmra.mxu0 %v1164
  %v1237 = vpop.f32.mrf.mxu0
  %v1238 = vadd.f32 %v1157, %v1237
  %v1239 = vpop.f32.mrf.mxu0
  %1240 = vdwg.mxu0
  %v1241 = vld [vmem:[%s7] sm:$0x1]
  %v1243 = vlaneseq
  %v1244 = vshrl.u32 %v1243, 7
  %v1245 = vsub.s32 0, %v1244
  %v1246 = vrot.slane %v1241, %v1245
  %v1248 = vadd.f32 %v1233, %v1246
  %v1249 = vadd.f32 %v1238, %v1246
  %vm1250 = vcmask 64512
  %1251 = vst.msk [vmem:[%s8] sm:$0xff] %vm1250, %v1248
  %1252 = vst.msk [vmem:[%s8 + $0x8] sm:$0xff] %vm1250, %v1249
  // Predicated region
  $region34: #{rnn_labeler_forward.1} parent=0 // pred_check
    _
  $region35: #{rnn_labeler_forward.1} parent=0 // pred_check_branch
    %1254 = sbr.rel (0) target = $region37
  $region36: #{rnn_labeler_forward.1} parent=0 // pred_region
    _
  $region37: #{rnn_labeler_forward.1} parent=0 // pred_fallthru
    _
  // Predicated region
  $region38: #{rnn_labeler_forward.1} parent=0 // pred_check
    _
  $region39: #{rnn_labeler_forward.1} parent=0 // pred_check_branch
    %1256 = sbr.rel (0) target = $region41
  $region40: #{rnn_labeler_forward.1} parent=0 // pred_region
    _
  $region41: #{rnn_labeler_forward.1} parent=0 // pred_fallthru
    _

</llo_original>
